<compile_context>
chip_gen: v7x
topology: tpu7x:2x2x1
jax: 0.10.0
libtpu: 0.0.40
codegen_flags: <defaults>
</compile_context>

<pallas_src>
import functools
import math

import jax
import jax.numpy as jnp
from jax.experimental import pallas as pl
from jax.experimental.pallas import tpu as pltpu


# ----------------------------- shared helpers -------------------------------

def _hardswish(x):
    # x * relu6(x + 3) / 6  (PyTorch nn.Hardswish)
    return x * jnp.clip(x + 3.0, 0.0, 6.0) * (1.0 / 6.0)


def _instance_norm_lastdim(z, eps=1e-5):
    # InstanceNorm1d on (B, C=num_agents, L=d_model): per-(b, agent) stats over
    # the last dim, biased variance, no affine.
    mu = jnp.mean(z, axis=-1, keepdims=True)
    var = jnp.mean((z - mu) * (z - mu), axis=-1, keepdims=True)
    return (z - mu) * jax.lax.rsqrt(var + eps)


def _round_up(a, m):
    return (a + m - 1) // m * m


# --------------------------------- kernel -----------------------------------

def value_net_kernel(x_ref,
                     w_in_ref, b_in_ref,
                     wq_ref, wk_ref, wv_ref, wo_ref,
                     wff1_ref, bff1_ref, wff2_ref, bff2_ref,
                     wh1_ref, bh1_ref, wh2t_ref, bh2_ref,
                     out_ref, *, d_k, d_v, n_agents):
    f32 = jnp.float32
    bf16 = jnp.bfloat16

    def mm(a, w_ref):
        # bf16 MXU operands, f32 accumulation.  Weights are already bf16.
        return jnp.dot(a.astype(bf16), w_ref[...], preferred_element_type=f32)

    x0 = x_ref[...]                                                # (C, F) f32
    C = x0.shape[0]
    G = C // n_agents                                              # static

    # Input projection + ReLU (elementwise in f32)
    x = jnp.maximum(mm(x0, w_in_ref) + b_in_ref[...], 0.0)        # (C, D)

    # ---- SelfAttentionLayer: grouped attention, no mask ----
    q = mm(x, wq_ref).reshape(G, n_agents, d_k)                    # f32
    k = mm(x, wk_ref).reshape(G, n_agents, d_k)
    v = mm(x, wv_ref).reshape(G, n_agents, d_v)

    score = jnp.einsum("gnd,gmd->gnm", q, k,
                       preferred_element_type=f32) * (1.0 / math.sqrt(d_k))
    score = score - jnp.max(score, axis=-1, keepdims=True)         # (G, N, N)
    e = jnp.exp(score)
    attn = e * pl.reciprocal(jnp.sum(e, axis=-1, keepdims=True), approx=True)
    ctx = jnp.einsum("gnm,gmd->gnd", attn, v,
                     preferred_element_type=f32).reshape(C, d_v)

    att_out = mm(ctx, wo_ref)                                      # (C, D)
    z = _instance_norm_lastdim(att_out + x)

    # ---- PositionWiseFeedForward ----
    h = _hardswish(mm(z, wff1_ref) + bff1_ref[...])
    ff = mm(h, wff2_ref) + bff2_ref[...]
    y = _instance_norm_lastdim(ff + z)

    # ---- Value head: lane-dense (1, H) @ (C, H)^T -> (1, C) ----
    h2 = _hardswish(mm(y, wh1_ref) + bh1_ref[...])
    vals = jax.lax.dot_general(wh2t_ref[...], h2.astype(bf16),
                               (((1,), (1,)), ((), ())),
                               preferred_element_type=f32) + bh2_ref[...]
    out_ref[0] = vals                                              # (1, C)


# --------------------------------- wrapper ----------------------------------

def value_net_forward(x, params, *, chunk_rows=None):
    B, N, F = x.shape
    f32 = jnp.float32
    bf16 = jnp.bfloat16
    d_model = params["w_in"].shape[1]
    d_k = params["wq"].shape[1]
    d_v = params["wv"].shape[1]
    hidden = params["wff1"].shape[1]

    # Matmul weights in bf16 (MXU operands), biases stay f32 (VPU adds).
    wh2t = params["wh2"].T                       # (1, hidden)
    weights = [
        params["w_in"].astype(bf16), params["b_in"].astype(f32),
        params["wq"].astype(bf16), params["wk"].astype(bf16),
        params["wv"].astype(bf16), params["wo"].astype(bf16),
        params["wff1"].astype(bf16), params["bff1"].astype(f32),
        params["wff2"].astype(bf16), params["bff2"].astype(f32),
        params["wh1"].astype(bf16), params["bh1"].astype(f32),
        wh2t.astype(bf16), params["bh2"].astype(f32).reshape(1, 1),
    ]

    rows = B * N
    if chunk_rows is None:
        unit_small = N * 8 // math.gcd(N, 8)        # lcm(N, 8)
        unit_lane = N * 128 // math.gcd(N, 128)     # lcm(N, 128)
        if unit_lane > 1024:
            # Pathological num_agents; fall back (non-lane-dense stores).
            unit_lane = unit_small
        if rows < 2 * unit_lane:
            # Tiny workload: don't pad real rows up to a 128-wide chunk, and
            # keep >= 2 chunks so the v7x megacore has work on both cores.
            chunk_rows = unit_small
        else:
            # Lane-dense output stores; grow chunk (fewer grid steps) while
            # keeping >= 2 chunks (attention cost is now linear in chunk).
            chunk_rows = unit_lane
            while chunk_rows * 2 <= 512 and rows >= 4 * chunk_rows:
                chunk_rows *= 2
    assert chunk_rows % N == 0
    rows_pad = _round_up(rows, chunk_rows)
    num_chunks = rows_pad // chunk_rows

    x_flat = x.reshape(rows, F).astype(f32)
    if rows_pad != rows:
        # Padding is a whole number of agent groups (rows and chunk are both
        # multiples of N), so dummy rows never attend to real rows.
        x_flat = jnp.pad(x_flat, ((0, rows_pad - rows), (0, 0)))

    def full_spec(arr):
        nd = arr.ndim
        return pl.BlockSpec(arr.shape, lambda i, _nd=nd: (0,) * _nd)

    in_specs = ([pl.BlockSpec((chunk_rows, F), lambda i: (i, 0))] +
                [full_spec(w) for w in weights])
    out_spec = pl.BlockSpec((1, 1, chunk_rows), lambda i: (i, 0, 0))

    flops_per_row = 2.0 * (F * d_model
                           + d_model * (2 * d_k + d_v)
                           + N * d_k + N * d_v
                           + d_v * d_model
                           + 2 * d_model * hidden
                           + d_model * hidden + hidden)
    cost = pl.CostEstimate(
        flops=int(flops_per_row * rows_pad),
        transcendentals=int(rows_pad * (N + 3)),
        bytes_accessed=int(x_flat.size * 4
                           + sum(int(w.size) * w.dtype.itemsize for w in weights)
                           + rows_pad * 4),
    )

    kernel = functools.partial(value_net_kernel, d_k=d_k, d_v=d_v, n_agents=N)
    out = pl.pallas_call(
        kernel,
        out_shape=jax.ShapeDtypeStruct((num_chunks, 1, chunk_rows), f32),
        grid_spec=pltpu.PrefetchScalarGridSpec(
            num_scalar_prefetch=0,
            grid=(num_chunks,),
            in_specs=in_specs,
            out_specs=out_spec,
        ),
        compiler_params=pltpu.CompilerParams(
            dimension_semantics=("parallel",)),
        cost_estimate=cost,
    )(x_flat, *weights)

    # (num_chunks, 1, chunk) -> drop padding rows -> (B, N, 1)
    return out.reshape(rows_pad)[:rows].reshape(B, N, 1)


# ------------------------- pure-JAX reference (check) ------------------------

def value_net_reference(x, params, d_k, *, operand_dtype=jnp.float32):
    """Reference forward. operand_dtype=bfloat16 mirrors the kernel's bf16 MXU
    operands (f32 accumulation); float32 is the exact PyTorch-semantics path."""
    f32 = jnp.float32
    od = operand_dtype
    p = params

    def mm(a, w):
        return jnp.dot(a.astype(od), w.astype(od), preferred_element_type=f32)

    h = jnp.maximum(mm(x, p["w_in"]) + p["b_in"], 0.0)
    q = mm(h, p["wq"]); k = mm(h, p["wk"]); v = mm(h, p["wv"])
    score = jnp.einsum("bnd,bmd->bnm", q, k,
                       preferred_element_type=f32) / math.sqrt(d_k)
    attn = jax.nn.softmax(score, axis=-1)
    ctx = jnp.einsum("bnm,bmd->bnd", attn, v, preferred_element_type=f32)
    z = _instance_norm_lastdim(mm(ctx, p["wo"]) + h)
    ff = mm(_hardswish(mm(z, p["wff1"]) + p["bff1"]), p["wff2"]) + p["bff2"]
    y = _instance_norm_lastdim(ff + z)
    h2 = _hardswish(mm(y, p["wh1"]) + p["bh1"])
    return mm(h2, p["wh2"]) + p["bh2"]


# ------------------------------ param init ----------------------------------

def init_params(key, input_size, d_model, d_k, d_v, hidden_size):
    ks = jax.random.split(key, 14)

    def lin_w(k, din, dout):
        return (jax.random.normal(k, (din, dout), jnp.float32)
                / jnp.sqrt(jnp.float32(din)))

    def lin_b(k, dout):
        return jax.random.normal(k, (1, dout), jnp.float32) * 0.01

    return {
        "w_in": lin_w(ks[0], input_size, d_model), "b_in": lin_b(ks[1], d_model),
        "wq": lin_w(ks[2], d_model, d_k),
        "wk": lin_w(ks[3], d_model, d_k),
        "wv": lin_w(ks[4], d_model, d_v),
        "wo": lin_w(ks[5], d_v, d_model),
        "wff1": lin_w(ks[6], d_model, hidden_size), "bff1": lin_b(ks[7], hidden_size),
        "wff2": lin_w(ks[8], hidden_size, d_model), "bff2": lin_b(ks[9], d_model),
        "wh1": lin_w(ks[10], d_model, hidden_size), "bh1": lin_b(ks[11], hidden_size),
        "wh2": lin_w(ks[12], hidden_size, 1), "bh2": lin_b(ks[13], 1),
    }


# ----------------------------------- main ------------------------------------

if __name__ == "__main__":
    B, N = 2, 8                 # batch (time steps), num_agents
    input_size = 8              # agent_self_state_length = 8 (fixed)
    d_model, d_k, d_v, hidden = 32, 32, 32, 32

    key = jax.random.PRNGKey(0)
    k_x, k_p = jax.random.split(key)
    x = jax.random.normal(k_x, (B, N, input_size), jnp.float32)
    params = init_params(k_p, input_size, d_model, d_k, d_v, hidden)

    out = jax.block_until_ready(value_net_forward(x, params))
    assert out.shape == (B, N, 1), out.shape

    # Primary check: pure-JAX reference with the same bf16 MXU-operand
    # numerics (f32 accumulation).  Residual differences: softmax approx
    # reciprocal + accumulation order.
    ref_bf16 = value_net_reference(x, params, d_k, operand_dtype=jnp.bfloat16)
    assert jnp.allclose(out, ref_bf16, rtol=1e-2, atol=1e-2), (
        "kernel mismatch vs bf16-operand reference",
        float(jnp.max(jnp.abs(out - ref_bf16))))

    # Sanity check vs the full-f32 reference: drift is bounded by bf16 operand
    # rounding compounded over ~7 matmul layers (accumulation stays f32).
    ref_f32 = value_net_reference(x, params, d_k)
    assert jnp.allclose(out, ref_f32, rtol=1e-1, atol=1e-1), (
        "kernel drifted too far from f32 reference",
        float(jnp.max(jnp.abs(out - ref_f32))))

    print("KERNEL_OK")
</pallas_src>

<mosaic_0001>
module attributes {stable_mosaic.version = 11 : i64} {
  func.func @value_net_kernel(%arg0: i32, %arg1: memref<8x8xf32, #tpu.memory_space<vmem>>, %arg2: memref<8x32xbf16, #tpu.memory_space<vmem>>, %arg3: memref<1x32xf32, #tpu.memory_space<vmem>>, %arg4: memref<32x32xbf16, #tpu.memory_space<vmem>>, %arg5: memref<32x32xbf16, #tpu.memory_space<vmem>>, %arg6: memref<32x32xbf16, #tpu.memory_space<vmem>>, %arg7: memref<32x32xbf16, #tpu.memory_space<vmem>>, %arg8: memref<32x32xbf16, #tpu.memory_space<vmem>>, %arg9: memref<1x32xf32, #tpu.memory_space<vmem>>, %arg10: memref<32x32xbf16, #tpu.memory_space<vmem>>, %arg11: memref<1x32xf32, #tpu.memory_space<vmem>>, %arg12: memref<32x32xbf16, #tpu.memory_space<vmem>>, %arg13: memref<1x32xf32, #tpu.memory_space<vmem>>, %arg14: memref<1x32xbf16, #tpu.memory_space<vmem>>, %arg15: memref<1x1xf32, #tpu.memory_space<vmem>>, %arg16: memref<1x1x8xf32, #tpu.memory_space<vmem>>) attributes {dimension_semantics = [#tpu.dimension_semantics<parallel>], iteration_bounds = array<i64: 2>, scalar_prefetch = 0 : i64, scratch_operands = 0 : i64, tpu.core_type = #tpu.core_type<tc>, window_params = [{transform_indices = @transform_0, window_bounds = array<i64: 8, 8>}, {pipeline_mode = #tpu.pipeline_mode<synchronous>, transform_indices = @transform_1, window_bounds = array<i64: 8, 32>}, {pipeline_mode = #tpu.pipeline_mode<synchronous>, transform_indices = @transform_2, window_bounds = array<i64: 1, 32>}, {pipeline_mode = #tpu.pipeline_mode<synchronous>, transform_indices = @transform_3, window_bounds = array<i64: 32, 32>}, {pipeline_mode = #tpu.pipeline_mode<synchronous>, transform_indices = @transform_4, window_bounds = array<i64: 32, 32>}, {pipeline_mode = #tpu.pipeline_mode<synchronous>, transform_indices = @transform_5, window_bounds = array<i64: 32, 32>}, {pipeline_mode = #tpu.pipeline_mode<synchronous>, transform_indices = @transform_6, window_bounds = array<i64: 32, 32>}, {pipeline_mode = #tpu.pipeline_mode<synchronous>, transform_indices = @transform_7, window_bounds = array<i64: 32, 32>}, {pipeline_mode = #tpu.pipeline_mode<synchronous>, transform_indices = @transform_8, window_bounds = array<i64: 1, 32>}, {pipeline_mode = #tpu.pipeline_mode<synchronous>, transform_indices = @transform_9, window_bounds = array<i64: 32, 32>}, {pipeline_mode = #tpu.pipeline_mode<synchronous>, transform_indices = @transform_10, window_bounds = array<i64: 1, 32>}, {pipeline_mode = #tpu.pipeline_mode<synchronous>, transform_indices = @transform_11, window_bounds = array<i64: 32, 32>}, {pipeline_mode = #tpu.pipeline_mode<synchronous>, transform_indices = @transform_12, window_bounds = array<i64: 1, 32>}, {pipeline_mode = #tpu.pipeline_mode<synchronous>, transform_indices = @transform_13, window_bounds = array<i64: 1, 32>}, {pipeline_mode = #tpu.pipeline_mode<synchronous>, transform_indices = @transform_14, window_bounds = array<i64: 1, 1>}, {transform_indices = @transform_15, window_bounds = array<i64: 1, 1, 8>}]} {
    %c0 = arith.constant 0 : index
    %c0_0 = arith.constant 0 : index
    %0 = vector.load %arg1[%c0, %c0_0] : memref<8x8xf32, #tpu.memory_space<vmem>>, vector<8x8xf32>
    %1 = arith.truncf %0 : vector<8x8xf32> to vector<8x8xbf16>
    %c0_1 = arith.constant 0 : index
    %c0_2 = arith.constant 0 : index
    %2 = vector.load %arg2[%c0_1, %c0_2] : memref<8x32xbf16, #tpu.memory_space<vmem>>, vector<8x32xbf16>
    %cst = arith.constant dense<0.000000e+00> : vector<8x32xf32>
    %3 = tpu.matmul %1, %2, %cst {dimension_numbers = #tpu.dot_dimension_numbers<[1], [0], [0], [1], [0, 0, 1, 1], [], []>} : vector<8x8xbf16>, vector<8x32xbf16>, vector<8x32xf32> -> vector<8x32xf32>
    %c0_3 = arith.constant 0 : index
    %c0_4 = arith.constant 0 : index
    %4 = vector.load %arg3[%c0_3, %c0_4] : memref<1x32xf32, #tpu.memory_space<vmem>>, vector<1x32xf32>
    %5 = vector.broadcast %4 : vector<1x32xf32> to vector<8x32xf32>
    %6 = arith.addf %3, %5 : vector<8x32xf32>
    %cst_5 = arith.constant 0.000000e+00 : f32
    %7 = vector.broadcast %cst_5 : f32 to vector<8x32xf32>
    %8 = arith.maximumf %6, %7 : vector<8x32xf32>
    %9 = arith.truncf %8 : vector<8x32xf32> to vector<8x32xbf16>
    %c0_6 = arith.constant 0 : index
    %c0_7 = arith.constant 0 : index
    %10 = vector.load %arg4[%c0_6, %c0_7] : memref<32x32xbf16, #tpu.memory_space<vmem>>, vector<32x32xbf16>
    %cst_8 = arith.constant dense<0.000000e+00> : vector<8x32xf32>
    %11 = tpu.matmul %9, %10, %cst_8 {dimension_numbers = #tpu.dot_dimension_numbers<[1], [0], [0], [1], [0, 0, 1, 1], [], []>} : vector<8x32xbf16>, vector<32x32xbf16>, vector<8x32xf32> -> vector<8x32xf32>
    %12 = vector.shape_cast %11 : vector<8x32xf32> to vector<1x8x32xf32>
    %13 = arith.truncf %8 : vector<8x32xf32> to vector<8x32xbf16>
    %c0_9 = arith.constant 0 : index
    %c0_10 = arith.constant 0 : index
    %14 = vector.load %arg5[%c0_9, %c0_10] : memref<32x32xbf16, #tpu.memory_space<vmem>>, vector<32x32xbf16>
    %cst_11 = arith.constant dense<0.000000e+00> : vector<8x32xf32>
    %15 = tpu.matmul %13, %14, %cst_11 {dimension_numbers = #tpu.dot_dimension_numbers<[1], [0], [0], [1], [0, 0, 1, 1], [], []>} : vector<8x32xbf16>, vector<32x32xbf16>, vector<8x32xf32> -> vector<8x32xf32>
    %16 = vector.shape_cast %15 : vector<8x32xf32> to vector<1x8x32xf32>
    %17 = arith.truncf %8 : vector<8x32xf32> to vector<8x32xbf16>
    %c0_12 = arith.constant 0 : index
    %c0_13 = arith.constant 0 : index
    %18 = vector.load %arg6[%c0_12, %c0_13] : memref<32x32xbf16, #tpu.memory_space<vmem>>, vector<32x32xbf16>
    %cst_14 = arith.constant dense<0.000000e+00> : vector<8x32xf32>
    %19 = tpu.matmul %17, %18, %cst_14 {dimension_numbers = #tpu.dot_dimension_numbers<[1], [0], [0], [1], [0, 0, 1, 1], [], []>} : vector<8x32xbf16>, vector<32x32xbf16>, vector<8x32xf32> -> vector<8x32xf32>
    %20 = vector.shape_cast %19 : vector<8x32xf32> to vector<1x8x32xf32>
    "tpu.trace_start"() <{level = 10 : i32, message = "gnd,gmd->gnm"}> : () -> ()
    %cst_15 = arith.constant dense<0.000000e+00> : vector<1x8x8xf32>
    %21 = tpu.matmul %12, %16, %cst_15 {dimension_numbers = #tpu.dot_dimension_numbers<[2], [2], [1], [1], [0, 0, 0, 1, 1, 1], [0], [0]>} : vector<1x8x32xf32>, vector<1x8x32xf32>, vector<1x8x8xf32> -> vector<1x8x8xf32>
    "tpu.trace_stop"() : () -> ()
    %cst_16 = arith.constant 0.176776692 : f32
    %22 = vector.broadcast %cst_16 : f32 to vector<1x8x8xf32>
    %23 = arith.mulf %21, %22 : vector<1x8x8xf32>
    %cst_17 = arith.constant dense<0xFF800000> : vector<1x8xf32>
    %24 = vector.multi_reduction <maximumf>, %23, %cst_17 [2] : vector<1x8x8xf32> to vector<1x8xf32>
    %25 = vector.shape_cast %24 : vector<1x8xf32> to vector<1x8x1xf32>
    %26 = vector.broadcast %25 : vector<1x8x1xf32> to vector<1x8x8xf32>
    %27 = arith.subf %23, %26 : vector<1x8x8xf32>
    %28 = math.exp %27 : vector<1x8x8xf32>
    %cst_18 = arith.constant dense<0.000000e+00> : vector<1x8xf32>
    %29 = vector.multi_reduction <add>, %28, %cst_18 [2] : vector<1x8x8xf32> to vector<1x8xf32>
    %30 = vector.shape_cast %29 : vector<1x8xf32> to vector<1x8x1xf32>
    %31 = tpu.reciprocal %30 {approx = true} : vector<1x8x1xf32> -> vector<1x8x1xf32>
    %32 = vector.broadcast %31 : vector<1x8x1xf32> to vector<1x8x8xf32>
    %33 = arith.mulf %28, %32 : vector<1x8x8xf32>
    "tpu.trace_start"() <{level = 10 : i32, message = "gnm,gmd->gnd"}> : () -> ()
    %cst_19 = arith.constant dense<0.000000e+00> : vector<1x8x32xf32>
    %34 = tpu.matmul %33, %20, %cst_19 {dimension_numbers = #tpu.dot_dimension_numbers<[2], [1], [1], [2], [0, 0, 0, 1, 1, 2], [0], [0]>} : vector<1x8x8xf32>, vector<1x8x32xf32>, vector<1x8x32xf32> -> vector<1x8x32xf32>
    "tpu.trace_stop"() : () -> ()
    %35 = vector.shape_cast %34 : vector<1x8x32xf32> to vector<8x32xf32>
    %36 = arith.truncf %35 : vector<8x32xf32> to vector<8x32xbf16>
    %c0_20 = arith.constant 0 : index
    %c0_21 = arith.constant 0 : index
    %37 = vector.load %arg7[%c0_20, %c0_21] : memref<32x32xbf16, #tpu.memory_space<vmem>>, vector<32x32xbf16>
    %cst_22 = arith.constant dense<0.000000e+00> : vector<8x32xf32>
    %38 = tpu.matmul %36, %37, %cst_22 {dimension_numbers = #tpu.dot_dimension_numbers<[1], [0], [0], [1], [0, 0, 1, 1], [], []>} : vector<8x32xbf16>, vector<32x32xbf16>, vector<8x32xf32> -> vector<8x32xf32>
    %39 = arith.addf %38, %8 : vector<8x32xf32>
    %cst_23 = arith.constant dense<0.000000e+00> : vector<8xf32>
    %40 = vector.multi_reduction <add>, %39, %cst_23 [1] : vector<8x32xf32> to vector<8xf32>
    %41 = vector.shape_cast %40 : vector<8xf32> to vector<8x1xf32>
    %cst_24 = arith.constant 3.200000e+01 : f32
    %42 = vector.broadcast %cst_24 : f32 to vector<8x1xf32>
    %43 = arith.divf %41, %42 : vector<8x1xf32>
    %44 = vector.broadcast %43 : vector<8x1xf32> to vector<8x32xf32>
    %45 = arith.subf %39, %44 : vector<8x32xf32>
    %46 = vector.broadcast %43 : vector<8x1xf32> to vector<8x32xf32>
    %47 = arith.subf %39, %46 : vector<8x32xf32>
    %48 = arith.mulf %45, %47 : vector<8x32xf32>
    %cst_25 = arith.constant dense<0.000000e+00> : vector<8xf32>
    %49 = vector.multi_reduction <add>, %48, %cst_25 [1] : vector<8x32xf32> to vector<8xf32>
    %50 = vector.shape_cast %49 : vector<8xf32> to vector<8x1xf32>
    %cst_26 = arith.constant 3.200000e+01 : f32
    %51 = vector.broadcast %cst_26 : f32 to vector<8x1xf32>
    %52 = arith.divf %50, %51 : vector<8x1xf32>
    %53 = vector.broadcast %43 : vector<8x1xf32> to vector<8x32xf32>
    %54 = arith.subf %39, %53 : vector<8x32xf32>
    %cst_27 = arith.constant 9.99999974E-6 : f32
    %55 = vector.broadcast %cst_27 : f32 to vector<8x1xf32>
    %56 = arith.addf %52, %55 : vector<8x1xf32>
    %57 = math.rsqrt %56 : vector<8x1xf32>
    %58 = vector.broadcast %57 : vector<8x1xf32> to vector<8x32xf32>
    %59 = arith.mulf %54, %58 : vector<8x32xf32>
    %60 = arith.truncf %59 : vector<8x32xf32> to vector<8x32xbf16>
    %c0_28 = arith.constant 0 : index
    %c0_29 = arith.constant 0 : index
    %61 = vector.load %arg8[%c0_28, %c0_29] : memref<32x32xbf16, #tpu.memory_space<vmem>>, vector<32x32xbf16>
    %cst_30 = arith.constant dense<0.000000e+00> : vector<8x32xf32>
    %62 = tpu.matmul %60, %61, %cst_30 {dimension_numbers = #tpu.dot_dimension_numbers<[1], [0], [0], [1], [0, 0, 1, 1], [], []>} : vector<8x32xbf16>, vector<32x32xbf16>, vector<8x32xf32> -> vector<8x32xf32>
    %c0_31 = arith.constant 0 : index
    %c0_32 = arith.constant 0 : index
    %63 = vector.load %arg9[%c0_31, %c0_32] : memref<1x32xf32, #tpu.memory_space<vmem>>, vector<1x32xf32>
    %64 = vector.broadcast %63 : vector<1x32xf32> to vector<8x32xf32>
    %65 = arith.addf %62, %64 : vector<8x32xf32>
    %cst_33 = arith.constant 3.000000e+00 : f32
    %66 = vector.broadcast %cst_33 : f32 to vector<8x32xf32>
    %67 = arith.addf %65, %66 : vector<8x32xf32>
    %cst_34 = arith.constant 0.000000e+00 : f32
    %cst_35 = arith.constant 6.000000e+00 : f32
    %68 = vector.broadcast %cst_34 : f32 to vector<8x32xf32>
    %69 = arith.maximumf %68, %67 : vector<8x32xf32>
    %70 = vector.broadcast %cst_35 : f32 to vector<8x32xf32>
    %71 = arith.minimumf %70, %69 : vector<8x32xf32>
    %72 = arith.mulf %65, %71 : vector<8x32xf32>
    %cst_36 = arith.constant 0.166666672 : f32
    %73 = vector.broadcast %cst_36 : f32 to vector<8x32xf32>
    %74 = arith.mulf %72, %73 : vector<8x32xf32>
    %75 = arith.truncf %74 : vector<8x32xf32> to vector<8x32xbf16>
    %c0_37 = arith.constant 0 : index
    %c0_38 = arith.constant 0 : index
    %76 = vector.load %arg10[%c0_37, %c0_38] : memref<32x32xbf16, #tpu.memory_space<vmem>>, vector<32x32xbf16>
    %cst_39 = arith.constant dense<0.000000e+00> : vector<8x32xf32>
    %77 = tpu.matmul %75, %76, %cst_39 {dimension_numbers = #tpu.dot_dimension_numbers<[1], [0], [0], [1], [0, 0, 1, 1], [], []>} : vector<8x32xbf16>, vector<32x32xbf16>, vector<8x32xf32> -> vector<8x32xf32>
    %c0_40 = arith.constant 0 : index
    %c0_41 = arith.constant 0 : index
    %78 = vector.load %arg11[%c0_40, %c0_41] : memref<1x32xf32, #tpu.memory_space<vmem>>, vector<1x32xf32>
    %79 = vector.broadcast %78 : vector<1x32xf32> to vector<8x32xf32>
    %80 = arith.addf %77, %79 : vector<8x32xf32>
    %81 = arith.addf %80, %59 : vector<8x32xf32>
    %cst_42 = arith.constant dense<0.000000e+00> : vector<8xf32>
    %82 = vector.multi_reduction <add>, %81, %cst_42 [1] : vector<8x32xf32> to vector<8xf32>
    %83 = vector.shape_cast %82 : vector<8xf32> to vector<8x1xf32>
    %cst_43 = arith.constant 3.200000e+01 : f32
    %84 = vector.broadcast %cst_43 : f32 to vector<8x1xf32>
    %85 = arith.divf %83, %84 : vector<8x1xf32>
    %86 = vector.broadcast %85 : vector<8x1xf32> to vector<8x32xf32>
    %87 = arith.subf %81, %86 : vector<8x32xf32>
    %88 = vector.broadcast %85 : vector<8x1xf32> to vector<8x32xf32>
    %89 = arith.subf %81, %88 : vector<8x32xf32>
    %90 = arith.mulf %87, %89 : vector<8x32xf32>
    %cst_44 = arith.constant dense<0.000000e+00> : vector<8xf32>
    %91 = vector.multi_reduction <add>, %90, %cst_44 [1] : vector<8x32xf32> to vector<8xf32>
    %92 = vector.shape_cast %91 : vector<8xf32> to vector<8x1xf32>
    %cst_45 = arith.constant 3.200000e+01 : f32
    %93 = vector.broadcast %cst_45 : f32 to vector<8x1xf32>
    %94 = arith.divf %92, %93 : vector<8x1xf32>
    %95 = vector.broadcast %85 : vector<8x1xf32> to vector<8x32xf32>
    %96 = arith.subf %81, %95 : vector<8x32xf32>
    %cst_46 = arith.constant 9.99999974E-6 : f32
    %97 = vector.broadcast %cst_46 : f32 to vector<8x1xf32>
    %98 = arith.addf %94, %97 : vector<8x1xf32>
    %99 = math.rsqrt %98 : vector<8x1xf32>
    %100 = vector.broadcast %99 : vector<8x1xf32> to vector<8x32xf32>
    %101 = arith.mulf %96, %100 : vector<8x32xf32>
    %102 = arith.truncf %101 : vector<8x32xf32> to vector<8x32xbf16>
    %c0_47 = arith.constant 0 : index
    %c0_48 = arith.constant 0 : index
    %103 = vector.load %arg12[%c0_47, %c0_48] : memref<32x32xbf16, #tpu.memory_space<vmem>>, vector<32x32xbf16>
    %cst_49 = arith.constant dense<0.000000e+00> : vector<8x32xf32>
    %104 = tpu.matmul %102, %103, %cst_49 {dimension_numbers = #tpu.dot_dimension_numbers<[1], [0], [0], [1], [0, 0, 1, 1], [], []>} : vector<8x32xbf16>, vector<32x32xbf16>, vector<8x32xf32> -> vector<8x32xf32>
    %c0_50 = arith.constant 0 : index
    %c0_51 = arith.constant 0 : index
    %105 = vector.load %arg13[%c0_50, %c0_51] : memref<1x32xf32, #tpu.memory_space<vmem>>, vector<1x32xf32>
    %106 = vector.broadcast %105 : vector<1x32xf32> to vector<8x32xf32>
    %107 = arith.addf %104, %106 : vector<8x32xf32>
    %cst_52 = arith.constant 3.000000e+00 : f32
    %108 = vector.broadcast %cst_52 : f32 to vector<8x32xf32>
    %109 = arith.addf %107, %108 : vector<8x32xf32>
    %cst_53 = arith.constant 0.000000e+00 : f32
    %cst_54 = arith.constant 6.000000e+00 : f32
    %110 = vector.broadcast %cst_53 : f32 to vector<8x32xf32>
    %111 = arith.maximumf %110, %109 : vector<8x32xf32>
    %112 = vector.broadcast %cst_54 : f32 to vector<8x32xf32>
    %113 = arith.minimumf %112, %111 : vector<8x32xf32>
    %114 = arith.mulf %107, %113 : vector<8x32xf32>
    %cst_55 = arith.constant 0.166666672 : f32
    %115 = vector.broadcast %cst_55 : f32 to vector<8x32xf32>
    %116 = arith.mulf %114, %115 : vector<8x32xf32>
    %c0_56 = arith.constant 0 : index
    %c0_57 = arith.constant 0 : index
    %117 = vector.load %arg14[%c0_56, %c0_57] : memref<1x32xbf16, #tpu.memory_space<vmem>>, vector<1x32xbf16>
    %118 = arith.truncf %116 : vector<8x32xf32> to vector<8x32xbf16>
    %cst_58 = arith.constant dense<0.000000e+00> : vector<1x8xf32>
    %119 = tpu.matmul %117, %118, %cst_58 {dimension_numbers = #tpu.dot_dimension_numbers<[1], [1], [0], [0], [0, 0, 1, 0], [], []>} : vector<1x32xbf16>, vector<8x32xbf16>, vector<1x8xf32> -> vector<1x8xf32>
    %c0_59 = arith.constant 0 : index
    %c0_60 = arith.constant 0 : index
    %120 = vector.load %arg15[%c0_59, %c0_60] : memref<1x1xf32, #tpu.memory_space<vmem>>, vector<1x1xf32>
    %121 = vector.broadcast %120 : vector<1x1xf32> to vector<1x8xf32>
    %122 = arith.addf %119, %121 : vector<1x8xf32>
    %c0_61 = arith.constant 0 : index
    %c0_62 = arith.constant 0 : index
    %c0_63 = arith.constant 0 : index
    %123 = vector.load %arg16[%c0_61, %c0_62, %c0_63] : memref<1x1x8xf32, #tpu.memory_space<vmem>>, vector<1x1x8xf32>
    %124 = vector.shape_cast %123 : vector<1x1x8xf32> to vector<1x8xf32>
    %125 = vector.shape_cast %122 : vector<1x8xf32> to vector<1x1x8xf32>
    tpu.vector_store %arg16[%c0_61, %c0_62, %c0_63], %125 {strides = array<i32>} : memref<1x1x8xf32, #tpu.memory_space<vmem>>, vector<1x1x8xf32>,
    return
  }
  func.func @transform_0(%arg0: i32) -> (i32, i32) {
    %c0_i32 = arith.constant 0 : i32
    %c0_i32_0 = arith.constant 0 : i32
    return %arg0, %c0_i32 : i32, i32
  }
  func.func @transform_1(%arg0: i32) -> (i32, i32) {
    %c0_i32 = arith.constant 0 : i32
    %c0_i32_0 = arith.constant 0 : i32
    %c0_i32_1 = arith.constant 0 : i32
    return %c0_i32, %c0_i32_0 : i32, i32
  }
  func.func @transform_2(%arg0: i32) -> (i32, i32) {
    %c0_i32 = arith.constant 0 : i32
    %c0_i32_0 = arith.constant 0 : i32
    %c0_i32_1 = arith.constant 0 : i32
    return %c0_i32, %c0_i32_0 : i32, i32
  }
  func.func @transform_3(%arg0: i32) -> (i32, i32) {
    %c0_i32 = arith.constant 0 : i32
    %c0_i32_0 = arith.constant 0 : i32
    %c0_i32_1 = arith.constant 0 : i32
    return %c0_i32, %c0_i32_0 : i32, i32
  }
  func.func @transform_4(%arg0: i32) -> (i32, i32) {
    %c0_i32 = arith.constant 0 : i32
    %c0_i32_0 = arith.constant 0 : i32
    %c0_i32_1 = arith.constant 0 : i32
    return %c0_i32, %c0_i32_0 : i32, i32
  }
  func.func @transform_5(%arg0: i32) -> (i32, i32) {
    %c0_i32 = arith.constant 0 : i32
    %c0_i32_0 = arith.constant 0 : i32
    %c0_i32_1 = arith.constant 0 : i32
    return %c0_i32, %c0_i32_0 : i32, i32
  }
  func.func @transform_6(%arg0: i32) -> (i32, i32) {
    %c0_i32 = arith.constant 0 : i32
    %c0_i32_0 = arith.constant 0 : i32
    %c0_i32_1 = arith.constant 0 : i32
    return %c0_i32, %c0_i32_0 : i32, i32
  }
  func.func @transform_7(%arg0: i32) -> (i32, i32) {
    %c0_i32 = arith.constant 0 : i32
    %c0_i32_0 = arith.constant 0 : i32
    %c0_i32_1 = arith.constant 0 : i32
    return %c0_i32, %c0_i32_0 : i32, i32
  }
  func.func @transform_8(%arg0: i32) -> (i32, i32) {
    %c0_i32 = arith.constant 0 : i32
    %c0_i32_0 = arith.constant 0 : i32
    %c0_i32_1 = arith.constant 0 : i32
    return %c0_i32, %c0_i32_0 : i32, i32
  }
  func.func @transform_9(%arg0: i32) -> (i32, i32) {
    %c0_i32 = arith.constant 0 : i32
    %c0_i32_0 = arith.constant 0 : i32
    %c0_i32_1 = arith.constant 0 : i32
    return %c0_i32, %c0_i32_0 : i32, i32
  }
  func.func @transform_10(%arg0: i32) -> (i32, i32) {
    %c0_i32 = arith.constant 0 : i32
    %c0_i32_0 = arith.constant 0 : i32
    %c0_i32_1 = arith.constant 0 : i32
    return %c0_i32, %c0_i32_0 : i32, i32
  }
  func.func @transform_11(%arg0: i32) -> (i32, i32) {
    %c0_i32 = arith.constant 0 : i32
    %c0_i32_0 = arith.constant 0 : i32
    %c0_i32_1 = arith.constant 0 : i32
    return %c0_i32, %c0_i32_0 : i32, i32
  }
  func.func @transform_12(%arg0: i32) -> (i32, i32) {
    %c0_i32 = arith.constant 0 : i32
    %c0_i32_0 = arith.constant 0 : i32
    %c0_i32_1 = arith.constant 0 : i32
    return %c0_i32, %c0_i32_0 : i32, i32
  }
  func.func @transform_13(%arg0: i32) -> (i32, i32) {
    %c0_i32 = arith.constant 0 : i32
    %c0_i32_0 = arith.constant 0 : i32
    %c0_i32_1 = arith.constant 0 : i32
    return %c0_i32, %c0_i32_0 : i32, i32
  }
  func.func @transform_14(%arg0: i32) -> (i32, i32) {
    %c0_i32 = arith.constant 0 : i32
    %c0_i32_0 = arith.constant 0 : i32
    %c0_i32_1 = arith.constant 0 : i32
    return %c0_i32, %c0_i32_0 : i32, i32
  }
  func.func @transform_15(%arg0: i32) -> (i32, i32, i32) {
    %c0_i32 = arith.constant 0 : i32
    %c0_i32_0 = arith.constant 0 : i32
    %c0_i32_1 = arith.constant 0 : i32
    return %arg0, %c0_i32, %c0_i32_0 : i32, i32, i32
  }
}

</mosaic_0001>

<llo_original>
// kernel: tpu_custom_call.1
$region0: #{tpu_custom_call.1}
  #allocation0 [shape = 'u32[]', space=smem, size = 0x4, offset = 0x4, fixed_abs, tag = 'smem constant byte address 0x4 - core index']
  #allocation1 [shape = 'u32[144,128]{1,0:T(1,128)}', space=vmem, size = 0x12000, scoped, tag = 'internal scratch']
  #allocation2 [shape = 'f32[1,1]{1,0:T(1,128)S(1)}', space=vmem, size = 0x200, scoped, tag = 'scoped memory for tpu_custom_call.1']
  %s0 = inlined_call_operand.vmem [shape: f32[16,8], index: 0, kind: input, shape index: {}]
  %s1 = inlined_call_operand.hbm [shape: bf16[8,32], index: 1, kind: input, shape index: {}]
  %s2 = inlined_call_operand.vmem [shape: f32[1,32], index: 2, kind: input, shape index: {}]
  %s3 = inlined_call_operand.vmem [shape: bf16[32,32], index: 3, kind: input, shape index: {}]
  %s4 = inlined_call_operand.vmem [shape: bf16[32,32], index: 4, kind: input, shape index: {}]
  %s5 = inlined_call_operand.hbm [shape: bf16[32,32], index: 5, kind: input, shape index: {}]
  %s6 = inlined_call_operand.vmem [shape: bf16[32,32], index: 6, kind: input, shape index: {}]
  %s7 = inlined_call_operand.hbm [shape: bf16[32,32], index: 7, kind: input, shape index: {}]
  %s8 = inlined_call_operand.hbm [shape: f32[1,32], index: 8, kind: input, shape index: {}]
  %s9 = inlined_call_operand.hbm [shape: bf16[32,32], index: 9, kind: input, shape index: {}]
  %s10 = inlined_call_operand.hbm [shape: f32[1,32], index: 10, kind: input, shape index: {}]
  %s11 = inlined_call_operand.vmem [shape: bf16[32,32], index: 11, kind: input, shape index: {}]
  %s12 = inlined_call_operand.vmem [shape: f32[1,32], index: 12, kind: input, shape index: {}]
  %s13 = inlined_call_operand.vmem [shape: bf16[1,32], index: 13, kind: input, shape index: {}]
  %s14 = inlined_call_operand.<no memory space> [shape: f32[1,1], index: 14, kind: input, shape index: {}]
  %s15 = inlined_call_operand.hbm [shape: f32[2,1,8], index: 15, kind: output, shape index: {}]
  %s16 = sld [smem:[#allocation0]]
  $region117: #{tpu_custom_call.1} parent=0
    _
  %s18 = ssub.s32 1, %s16
  %s19 = scalar_select 0, %s18, %s16
  %v20 = vstv %s14
  %21 = vst [vmem:[#allocation2] sm:$0x1] %v20
  $region1: #{tpu_custom_call.1} parent=0
    #allocation3 [shape = 'u8[2048]{0}', space=vmem, size = 0x800, scoped, tag = 'input window, operand 1, single buffered']
    #allocation4 [shape = 's32[2]{0}', space=sflag, size = 0x8, scoped, tag = 'scoped memory for tpu_custom_call.1']
    #allocation5 [shape = 's32[2]{0}', space=sflag, size = 0x8, scoped, tag = 'scoped memory for tpu_custom_call.1']
    #allocation6 [shape = 'u8[8192]{0}', space=vmem, size = 0x2000, scoped, tag = 'input window, operand 5, single buffered']
    #allocation7 [shape = 's32[1]{0}', space=sflag, size = 0x4, scoped, tag = 'scoped memory for tpu_custom_call.1']
    #allocation8 [shape = 'u8[8192]{0}', space=vmem, size = 0x2000, scoped, tag = 'input window, operand 7, single buffered']
    #allocation9 [shape = 'u8[512]{0}', space=vmem, size = 0x400, scoped, tag = 'input window, operand 8, single buffered']
    #allocation10 [shape = 's32[1]{0}', space=sflag, size = 0x4, scoped, tag = 'scoped memory for tpu_custom_call.1']
    #allocation11 [shape = 'u8[8192]{0}', space=vmem, size = 0x2000, scoped, tag = 'input window, operand 9, single buffered']
    #allocation12 [shape = 'u8[512]{0}', space=vmem, size = 0x400, scoped, tag = 'input window, operand 10, single buffered']
    #allocation13 [shape = 's32[1]{0}', space=sflag, size = 0x4, scoped, tag = 'scoped memory for tpu_custom_call.1']
    #allocation14 [shape = 'u8[1024]{0}', space=vmem, size = 0x400, scoped, tag = 'output window, operand 0']
    %22 = vsyncpa [#allocation4], 0
    %23 = vsyncpa [#allocation7], 0
    %24 = vsyncpa [#allocation10], 0
    %25 = vsyncpa [#allocation13], 0
    %26 = vsyncpa [#allocation5], 0
    %s27 = scalar_lea.sflag [#allocation5], 1
    %28 = vsyncpa %s27, 0
    loop: start=0, step=1, limit=4
    $region2: #{tpu_custom_call.1} parent=1 // loop_pre_header
      _
    $region3: #{tpu_custom_call.1} parent=1 // loop_header
      %s30 = sphi 0, %s34
      %p31 = scmp.ge.s32.totalorder %s30, 4
      %s40 = sphi 0, %s42
      %s43 = sphi 0, %s40
      %s44 = sphi 0, %s43
      %s60 = sphi 0, %s44
      %s64 = sphi 0, %s64
      %s66 = sphi 0, %s64
      %s67 = sphi 0, %s66
      %s81 = sphi 0, %s67
      %s85 = sphi 0, %s85
      %s87 = sphi 0, %s85
      %s88 = sphi 0, %s87
      %s102 = sphi 0, %s88
      %s106 = sphi 0, %s106
      %s108 = sphi 0, %s106
      %s109 = sphi 0, %s108
      %s123 = sphi 0, %s109
      %s127 = sphi 0, %s127
      %s129 = sphi 0, %s127
      %s130 = sphi 0, %s129
      %s144 = sphi 0, %s130
      %s148 = sphi 0, %s148
      %s150 = sphi 0, %s148
      %s151 = sphi 0, %s150
      %s165 = sphi 0, %s151
      %s169 = sphi 0, %s169
      %s171 = sphi 0, %s169
      %s172 = sphi 0, %s171
      %s186 = sphi 0, %s172
      %s190 = sphi 0, %s190
      %s192 = sphi 0, %s190
      %s193 = sphi 0, %s192
      %s207 = sphi 0, %s193
      %s211 = sphi 0, %s211
      %s213 = sphi 0, %s211
      %s214 = sphi 0, %s213
      %s228 = sphi 0, %s214
      %s232 = sphi 0, %s232
      %s234 = sphi 0, %s232
      %s235 = sphi 0, %s234
      %s249 = sphi 0, %s235
      %s253 = sphi 0, %s253
      %s255 = sphi 0, %s253
      %s256 = sphi 0, %s255
      %s270 = sphi 0, %s256
      %s274 = sphi 0, %s274
      %s276 = sphi 0, %s274
      %s277 = sphi 0, %s276
      %s291 = sphi 0, %s277
      %s295 = sphi 0, %s295
      %s297 = sphi 0, %s295
      %s298 = sphi 0, %s297
      %s312 = sphi 0, %s298
      %s316 = sphi 0, %s316
      %s318 = sphi 0, %s316
      %s319 = sphi 0, %s318
      %s333 = sphi 0, %s319
      %s337 = sphi 0, %s337
      %s339 = sphi 0, %s337
      %s340 = sphi 0, %s339
      %s354 = sphi 0, %s340
      %s360 = sphi 0, %s362
      %s363 = sphi 0, %s360
      %s364 = sphi 0, %s363
      %s380 = sphi 0, %s364
    $region4: #{tpu_custom_call.1} parent=1 // loop_header_branch
      %33 = sbr.rel (%p31) target = $region8
    $region5: #{tpu_custom_call.1} parent=1 // loop_body
      %s35 = ssub.s32 %s30, 1
      %s36 = ssub.s32 %s30, 2
      %s37 = sadd.s32 %s30, 1
      %s38 = ssub.s32 %s30, %s37
      %p39 = scmp.eq.s32.totalorder %s38, 0
      %s41 = sadd.s32 %s40, 1
      %s42 = scalar_select %p39, %s40, %s41
      %p45 = pneg %p39
      %p46 = scmp.eq.s32.totalorder %s30, 1
      %p47 = por %p45, %p46
      %p48 = scmp.ne.s32.totalorder %s40, %s43
      %p49 = scmp.eq.s32.totalorder %s30, 0
      %p50 = por %p48, %p49
      %p51 = scmp.ne.s32.totalorder %s40, %s43
      %p52 = scmp.eq.s32.totalorder %s35, 1
      %p53 = por %p51, %p52
      %p54 = scmp.ne.s32.totalorder %s43, %s44
      %p55 = scmp.eq.s32.totalorder %s35, 0
      %p56 = por %p54, %p55
      %p57 = scmp.ne.s32.totalorder %s43, %s44
      %p58 = scmp.eq.s32.totalorder %s36, 1
      %p59 = por %p57, %p58
      %p61 = scmp.ne.s32.totalorder %s44, %s60
      %p62 = scmp.eq.s32.totalorder %s36, 0
      %p63 = por %p61, %p62
      %s65 = sadd.s32 %s64, 1
      %p68 = scmp.eq.s32.totalorder %s30, 1
      %p69 = scmp.ne.s32.totalorder %s64, %s66
      %p70 = scmp.eq.s32.totalorder %s30, 0
      %p71 = por %p69, %p70
      %p72 = scmp.ne.s32.totalorder %s64, %s66
      %p73 = scmp.eq.s32.totalorder %s35, 1
      %p74 = por %p72, %p73
      %p75 = scmp.ne.s32.totalorder %s66, %s67
      %p76 = scmp.eq.s32.totalorder %s35, 0
      %p77 = por %p75, %p76
      %p78 = scmp.ne.s32.totalorder %s66, %s67
      %p79 = scmp.eq.s32.totalorder %s36, 1
      %p80 = por %p78, %p79
      %p82 = scmp.ne.s32.totalorder %s67, %s81
      %p83 = scmp.eq.s32.totalorder %s36, 0
      %p84 = por %p82, %p83
      %s86 = sadd.s32 %s85, 1
      %p89 = scmp.eq.s32.totalorder %s30, 1
      %p90 = scmp.ne.s32.totalorder %s85, %s87
      %p91 = scmp.eq.s32.totalorder %s30, 0
      %p92 = por %p90, %p91
      %p93 = scmp.ne.s32.totalorder %s85, %s87
      %p94 = scmp.eq.s32.totalorder %s35, 1
      %p95 = por %p93, %p94
      %p96 = scmp.ne.s32.totalorder %s87, %s88
      %p97 = scmp.eq.s32.totalorder %s35, 0
      %p98 = por %p96, %p97
      %p99 = scmp.ne.s32.totalorder %s87, %s88
      %p100 = scmp.eq.s32.totalorder %s36, 1
      %p101 = por %p99, %p100
      %p103 = scmp.ne.s32.totalorder %s88, %s102
      %p104 = scmp.eq.s32.totalorder %s36, 0
      %p105 = por %p103, %p104
      %s107 = sadd.s32 %s106, 1
      %p110 = scmp.eq.s32.totalorder %s30, 1
      %p111 = scmp.ne.s32.totalorder %s106, %s108
      %p112 = scmp.eq.s32.totalorder %s30, 0
      %p113 = por %p111, %p112
      %p114 = scmp.ne.s32.totalorder %s106, %s108
      %p115 = scmp.eq.s32.totalorder %s35, 1
      %p116 = por %p114, %p115
      %p117 = scmp.ne.s32.totalorder %s108, %s109
      %p118 = scmp.eq.s32.totalorder %s35, 0
      %p119 = por %p117, %p118
      %p120 = scmp.ne.s32.totalorder %s108, %s109
      %p121 = scmp.eq.s32.totalorder %s36, 1
      %p122 = por %p120, %p121
      %p124 = scmp.ne.s32.totalorder %s109, %s123
      %p125 = scmp.eq.s32.totalorder %s36, 0
      %p126 = por %p124, %p125
      %s128 = sadd.s32 %s127, 1
      %p131 = scmp.eq.s32.totalorder %s30, 1
      %p132 = scmp.ne.s32.totalorder %s127, %s129
      %p133 = scmp.eq.s32.totalorder %s30, 0
      %p134 = por %p132, %p133
      %p135 = scmp.ne.s32.totalorder %s127, %s129
      %p136 = scmp.eq.s32.totalorder %s35, 1
      %p137 = por %p135, %p136
      %p138 = scmp.ne.s32.totalorder %s129, %s130
      %p139 = scmp.eq.s32.totalorder %s35, 0
      %p140 = por %p138, %p139
      %p141 = scmp.ne.s32.totalorder %s129, %s130
      %p142 = scmp.eq.s32.totalorder %s36, 1
      %p143 = por %p141, %p142
      %p145 = scmp.ne.s32.totalorder %s130, %s144
      %p146 = scmp.eq.s32.totalorder %s36, 0
      %p147 = por %p145, %p146
      %s149 = sadd.s32 %s148, 1
      %p152 = scmp.eq.s32.totalorder %s30, 1
      %p153 = scmp.ne.s32.totalorder %s148, %s150
      %p154 = scmp.eq.s32.totalorder %s30, 0
      %p155 = por %p153, %p154
      %p156 = scmp.ne.s32.totalorder %s148, %s150
      %p157 = scmp.eq.s32.totalorder %s35, 1
      %p158 = por %p156, %p157
      %p159 = scmp.ne.s32.totalorder %s150, %s151
      %p160 = scmp.eq.s32.totalorder %s35, 0
      %p161 = por %p159, %p160
      %p162 = scmp.ne.s32.totalorder %s150, %s151
      %p163 = scmp.eq.s32.totalorder %s36, 1
      %p164 = por %p162, %p163
      %p166 = scmp.ne.s32.totalorder %s151, %s165
      %p167 = scmp.eq.s32.totalorder %s36, 0
      %p168 = por %p166, %p167
      %s170 = sadd.s32 %s169, 1
      %p173 = scmp.eq.s32.totalorder %s30, 1
      %p174 = scmp.ne.s32.totalorder %s169, %s171
      %p175 = scmp.eq.s32.totalorder %s30, 0
      %p176 = por %p174, %p175
      %p177 = scmp.ne.s32.totalorder %s169, %s171
      %p178 = scmp.eq.s32.totalorder %s35, 1
      %p179 = por %p177, %p178
      %p180 = scmp.ne.s32.totalorder %s171, %s172
      %p181 = scmp.eq.s32.totalorder %s35, 0
      %p182 = por %p180, %p181
      %p183 = scmp.ne.s32.totalorder %s171, %s172
      %p184 = scmp.eq.s32.totalorder %s36, 1
      %p185 = por %p183, %p184
      %p187 = scmp.ne.s32.totalorder %s172, %s186
      %p188 = scmp.eq.s32.totalorder %s36, 0
      %p189 = por %p187, %p188
      %s191 = sadd.s32 %s190, 1
      %p194 = scmp.eq.s32.totalorder %s30, 1
      %p195 = scmp.ne.s32.totalorder %s190, %s192
      %p196 = scmp.eq.s32.totalorder %s30, 0
      %p197 = por %p195, %p196
      %p198 = scmp.ne.s32.totalorder %s190, %s192
      %p199 = scmp.eq.s32.totalorder %s35, 1
      %p200 = por %p198, %p199
      %p201 = scmp.ne.s32.totalorder %s192, %s193
      %p202 = scmp.eq.s32.totalorder %s35, 0
      %p203 = por %p201, %p202
      %p204 = scmp.ne.s32.totalorder %s192, %s193
      %p205 = scmp.eq.s32.totalorder %s36, 1
      %p206 = por %p204, %p205
      %p208 = scmp.ne.s32.totalorder %s193, %s207
      %p209 = scmp.eq.s32.totalorder %s36, 0
      %p210 = por %p208, %p209
      %s212 = sadd.s32 %s211, 1
      %p215 = scmp.eq.s32.totalorder %s30, 1
      %p216 = scmp.ne.s32.totalorder %s211, %s213
      %p217 = scmp.eq.s32.totalorder %s30, 0
      %p218 = por %p216, %p217
      %p219 = scmp.ne.s32.totalorder %s211, %s213
      %p220 = scmp.eq.s32.totalorder %s35, 1
      %p221 = por %p219, %p220
      %p222 = scmp.ne.s32.totalorder %s213, %s214
      %p223 = scmp.eq.s32.totalorder %s35, 0
      %p224 = por %p222, %p223
      %p225 = scmp.ne.s32.totalorder %s213, %s214
      %p226 = scmp.eq.s32.totalorder %s36, 1
      %p227 = por %p225, %p226
      %p229 = scmp.ne.s32.totalorder %s214, %s228
      %p230 = scmp.eq.s32.totalorder %s36, 0
      %p231 = por %p229, %p230
      %s233 = sadd.s32 %s232, 1
      %p236 = scmp.eq.s32.totalorder %s30, 1
      %p237 = scmp.ne.s32.totalorder %s232, %s234
      %p238 = scmp.eq.s32.totalorder %s30, 0
      %p239 = por %p237, %p238
      %p240 = scmp.ne.s32.totalorder %s232, %s234
      %p241 = scmp.eq.s32.totalorder %s35, 1
      %p242 = por %p240, %p241
      %p243 = scmp.ne.s32.totalorder %s234, %s235
      %p244 = scmp.eq.s32.totalorder %s35, 0
      %p245 = por %p243, %p244
      %p246 = scmp.ne.s32.totalorder %s234, %s235
      %p247 = scmp.eq.s32.totalorder %s36, 1
      %p248 = por %p246, %p247
      %p250 = scmp.ne.s32.totalorder %s235, %s249
      %p251 = scmp.eq.s32.totalorder %s36, 0
      %p252 = por %p250, %p251
      %s254 = sadd.s32 %s253, 1
      %p257 = scmp.eq.s32.totalorder %s30, 1
      %p258 = scmp.ne.s32.totalorder %s253, %s255
      %p259 = scmp.eq.s32.totalorder %s30, 0
      %p260 = por %p258, %p259
      %p261 = scmp.ne.s32.totalorder %s253, %s255
      %p262 = scmp.eq.s32.totalorder %s35, 1
      %p263 = por %p261, %p262
      %p264 = scmp.ne.s32.totalorder %s255, %s256
      %p265 = scmp.eq.s32.totalorder %s35, 0
      %p266 = por %p264, %p265
      %p267 = scmp.ne.s32.totalorder %s255, %s256
      %p268 = scmp.eq.s32.totalorder %s36, 1
      %p269 = por %p267, %p268
      %p271 = scmp.ne.s32.totalorder %s256, %s270
      %p272 = scmp.eq.s32.totalorder %s36, 0
      %p273 = por %p271, %p272
      %s275 = sadd.s32 %s274, 1
      %p278 = scmp.eq.s32.totalorder %s30, 1
      %p279 = scmp.ne.s32.totalorder %s274, %s276
      %p280 = scmp.eq.s32.totalorder %s30, 0
      %p281 = por %p279, %p280
      %p282 = scmp.ne.s32.totalorder %s274, %s276
      %p283 = scmp.eq.s32.totalorder %s35, 1
      %p284 = por %p282, %p283
      %p285 = scmp.ne.s32.totalorder %s276, %s277
      %p286 = scmp.eq.s32.totalorder %s35, 0
      %p287 = por %p285, %p286
      %p288 = scmp.ne.s32.totalorder %s276, %s277
      %p289 = scmp.eq.s32.totalorder %s36, 1
      %p290 = por %p288, %p289
      %p292 = scmp.ne.s32.totalorder %s277, %s291
      %p293 = scmp.eq.s32.totalorder %s36, 0
      %p294 = por %p292, %p293
      %s296 = sadd.s32 %s295, 1
      %p299 = scmp.eq.s32.totalorder %s30, 1
      %p300 = scmp.ne.s32.totalorder %s295, %s297
      %p301 = scmp.eq.s32.totalorder %s30, 0
      %p302 = por %p300, %p301
      %p303 = scmp.ne.s32.totalorder %s295, %s297
      %p304 = scmp.eq.s32.totalorder %s35, 1
      %p305 = por %p303, %p304
      %p306 = scmp.ne.s32.totalorder %s297, %s298
      %p307 = scmp.eq.s32.totalorder %s35, 0
      %p308 = por %p306, %p307
      %p309 = scmp.ne.s32.totalorder %s297, %s298
      %p310 = scmp.eq.s32.totalorder %s36, 1
      %p311 = por %p309, %p310
      %p313 = scmp.ne.s32.totalorder %s298, %s312
      %p314 = scmp.eq.s32.totalorder %s36, 0
      %p315 = por %p313, %p314
      %s317 = sadd.s32 %s316, 1
      %p320 = scmp.eq.s32.totalorder %s30, 1
      %p321 = scmp.ne.s32.totalorder %s316, %s318
      %p322 = scmp.eq.s32.totalorder %s30, 0
      %p323 = por %p321, %p322
      %p324 = scmp.ne.s32.totalorder %s316, %s318
      %p325 = scmp.eq.s32.totalorder %s35, 1
      %p326 = por %p324, %p325
      %p327 = scmp.ne.s32.totalorder %s318, %s319
      %p328 = scmp.eq.s32.totalorder %s35, 0
      %p329 = por %p327, %p328
      %p330 = scmp.ne.s32.totalorder %s318, %s319
      %p331 = scmp.eq.s32.totalorder %s36, 1
      %p332 = por %p330, %p331
      %p334 = scmp.ne.s32.totalorder %s319, %s333
      %p335 = scmp.eq.s32.totalorder %s36, 0
      %p336 = por %p334, %p335
      %s338 = sadd.s32 %s337, 1
      %p341 = scmp.eq.s32.totalorder %s30, 1
      %p342 = scmp.ne.s32.totalorder %s337, %s339
      %p343 = scmp.eq.s32.totalorder %s30, 0
      %p344 = por %p342, %p343
      %p345 = scmp.ne.s32.totalorder %s337, %s339
      %p346 = scmp.eq.s32.totalorder %s35, 1
      %p347 = por %p345, %p346
      %p348 = scmp.ne.s32.totalorder %s339, %s340
      %p349 = scmp.eq.s32.totalorder %s35, 0
      %p350 = por %p348, %p349
      %p351 = scmp.ne.s32.totalorder %s339, %s340
      %p352 = scmp.eq.s32.totalorder %s36, 1
      %p353 = por %p351, %p352
      %p355 = scmp.ne.s32.totalorder %s340, %s354
      %p356 = scmp.eq.s32.totalorder %s36, 0
      %p357 = por %p355, %p356
      %s358 = ssub.s32 %s30, %s37
      %p359 = scmp.eq.s32.totalorder %s358, 0
      %s361 = sadd.s32 %s360, 1
      %s362 = scalar_select %p359, %s360, %s361
      %p365 = pneg %p359
      %p366 = scmp.eq.s32.totalorder %s30, 1
      %p367 = por %p365, %p366
      %p368 = scmp.ne.s32.totalorder %s360, %s363
      %p369 = scmp.eq.s32.totalorder %s30, 0
      %p370 = por %p368, %p369
      %p371 = scmp.ne.s32.totalorder %s360, %s363
      %p372 = scmp.eq.s32.totalorder %s35, 1
      %p373 = por %p371, %p372
      %p374 = scmp.ne.s32.totalorder %s363, %s364
      %p375 = scmp.eq.s32.totalorder %s35, 0
      %p376 = por %p374, %p375
      %p377 = scmp.ne.s32.totalorder %s363, %s364
      %p378 = scmp.eq.s32.totalorder %s36, 1
      %p379 = por %p377, %p378
      %p381 = scmp.ne.s32.totalorder %s364, %s380
      %p382 = scmp.eq.s32.totalorder %s36, 0
      %p383 = por %p381, %p382
      %p384 = scmp.le.s32.totalorder 1, %s30
      %p385 = scmp.lt.s32.totalorder %s30, 3
      %p386 = pnand %p384, %p385
      %p387 = pneg %p386
      // Predicated region
      $region9: #{tpu_custom_call.1} parent=5 // pred_check
        _
      $region10: #{tpu_custom_call.1} parent=5 // pred_check_branch
        %389 = sbr.rel (%p386) target = $region12
      $region11: #{tpu_custom_call.1} parent=5 // pred_region
        %s390 = ssub.s32 %s30, 1
        // Predicated region
        $region13: #{tpu_custom_call.1} parent=11 // pred_check
          %p391 = pneg %p77
        $region14: #{tpu_custom_call.1} parent=11 // pred_check_branch
          %393 = sbr.rel (%p391) target = $region16
        $region15: #{tpu_custom_call.1} parent=11 // pred_region
          %s395 = ssub.s32 64, 64
          %396 = vsyncadd [#allocation4], %s395
          %s398 = sshll.u32 [#allocation3], 4
          %s399 = int_to_ptr.vmem [resolvable:$true] %s398
          %401 = dma.hbm_to_vmem [thread:$0]  %s1, 64, %s399, [#allocation4]
        $region16: #{tpu_custom_call.1} parent=11 // pred_fallthru
          _
        // Predicated region
        $region17: #{tpu_custom_call.1} parent=11 // pred_check
          %p402 = pneg %p98
        $region18: #{tpu_custom_call.1} parent=11 // pred_check_branch
          %404 = sbr.rel (%p402) target = $region20
        $region19: #{tpu_custom_call.1} parent=11 // pred_region
          _
        $region20: #{tpu_custom_call.1} parent=11 // pred_fallthru
          _
        // Predicated region
        $region21: #{tpu_custom_call.1} parent=11 // pred_check
          %p405 = pneg %p119
        $region22: #{tpu_custom_call.1} parent=11 // pred_check_branch
          %407 = sbr.rel (%p405) target = $region24
        $region23: #{tpu_custom_call.1} parent=11 // pred_region
          _
        $region24: #{tpu_custom_call.1} parent=11 // pred_fallthru
          _
        // Predicated region
        $region25: #{tpu_custom_call.1} parent=11 // pred_check
          %p408 = pneg %p140
        $region26: #{tpu_custom_call.1} parent=11 // pred_check_branch
          %410 = sbr.rel (%p408) target = $region28
        $region27: #{tpu_custom_call.1} parent=11 // pred_region
          _
        $region28: #{tpu_custom_call.1} parent=11 // pred_fallthru
          _
        // Predicated region
        $region29: #{tpu_custom_call.1} parent=11 // pred_check
          %p411 = pneg %p161
        $region30: #{tpu_custom_call.1} parent=11 // pred_check_branch
          %413 = sbr.rel (%p411) target = $region32
        $region31: #{tpu_custom_call.1} parent=11 // pred_region
          %s415 = ssub.s32 256, 256
          %416 = vsyncadd [#allocation7], %s415
          %s417 = sshll.u32 [#allocation6], 4
          %s418 = int_to_ptr.vmem [resolvable:$true] %s417
          %423 = dma.hbm_to_vmem [thread:$0]  %s5, 256, %s418, [#allocation7], 64, 64, 4
        $region32: #{tpu_custom_call.1} parent=11 // pred_fallthru
          _
        // Predicated region
        $region33: #{tpu_custom_call.1} parent=11 // pred_check
          %p424 = pneg %p182
        $region34: #{tpu_custom_call.1} parent=11 // pred_check_branch
          %426 = sbr.rel (%p424) target = $region36
        $region35: #{tpu_custom_call.1} parent=11 // pred_region
          _
        $region36: #{tpu_custom_call.1} parent=11 // pred_fallthru
          _
        // Predicated region
        $region37: #{tpu_custom_call.1} parent=11 // pred_check
          %p427 = pneg %p203
        $region38: #{tpu_custom_call.1} parent=11 // pred_check_branch
          %429 = sbr.rel (%p427) target = $region40
        $region39: #{tpu_custom_call.1} parent=11 // pred_region
          %s431 = ssub.s32 256, 256
          %432 = vsyncadd [#allocation7], %s431
          %s433 = sshll.u32 [#allocation8], 4
          %s434 = int_to_ptr.vmem [resolvable:$true] %s433
          %439 = dma.hbm_to_vmem [thread:$0]  %s7, 256, %s434, [#allocation7], 64, 64, 4
        $region40: #{tpu_custom_call.1} parent=11 // pred_fallthru
          _
        // Predicated region
        $region41: #{tpu_custom_call.1} parent=11 // pred_check
          %p440 = pneg %p224
        $region42: #{tpu_custom_call.1} parent=11 // pred_check_branch
          %442 = sbr.rel (%p440) target = $region44
        $region43: #{tpu_custom_call.1} parent=11 // pred_region
          %s444 = ssub.s32 16, 16
          %445 = vsyncadd [#allocation10], %s444
          %s447 = sshll.u32 [#allocation9], 4
          %s448 = int_to_ptr.vmem [resolvable:$true] %s447
          %450 = dma.hbm_to_vmem [thread:$0]  %s8, 16, %s448, [#allocation10]
        $region44: #{tpu_custom_call.1} parent=11 // pred_fallthru
          _
        // Predicated region
        $region45: #{tpu_custom_call.1} parent=11 // pred_check
          %p451 = pneg %p245
        $region46: #{tpu_custom_call.1} parent=11 // pred_check_branch
          %453 = sbr.rel (%p451) target = $region48
        $region47: #{tpu_custom_call.1} parent=11 // pred_region
          %s455 = ssub.s32 256, 256
          %456 = vsyncadd [#allocation10], %s455
          %s457 = sshll.u32 [#allocation11], 4
          %s458 = int_to_ptr.vmem [resolvable:$true] %s457
          %463 = dma.hbm_to_vmem [thread:$0]  %s9, 256, %s458, [#allocation10], 64, 64, 4
        $region48: #{tpu_custom_call.1} parent=11 // pred_fallthru
          _
        // Predicated region
        $region49: #{tpu_custom_call.1} parent=11 // pred_check
          %p464 = pneg %p266
        $region50: #{tpu_custom_call.1} parent=11 // pred_check_branch
          %466 = sbr.rel (%p464) target = $region52
        $region51: #{tpu_custom_call.1} parent=11 // pred_region
          %s468 = ssub.s32 16, 16
          %469 = vsyncadd [#allocation13], %s468
          %s471 = sshll.u32 [#allocation12], 4
          %s472 = int_to_ptr.vmem [resolvable:$true] %s471
          %474 = dma.hbm_to_vmem [thread:$0]  %s10, 16, %s472, [#allocation13]
        $region52: #{tpu_custom_call.1} parent=11 // pred_fallthru
          _
        // Predicated region
        $region53: #{tpu_custom_call.1} parent=11 // pred_check
          %p475 = pneg %p287
        $region54: #{tpu_custom_call.1} parent=11 // pred_check_branch
          %477 = sbr.rel (%p475) target = $region56
        $region55: #{tpu_custom_call.1} parent=11 // pred_region
          _
        $region56: #{tpu_custom_call.1} parent=11 // pred_fallthru
          _
        // Predicated region
        $region57: #{tpu_custom_call.1} parent=11 // pred_check
          %p478 = pneg %p308
        $region58: #{tpu_custom_call.1} parent=11 // pred_check_branch
          %480 = sbr.rel (%p478) target = $region60
        $region59: #{tpu_custom_call.1} parent=11 // pred_region
          _
        $region60: #{tpu_custom_call.1} parent=11 // pred_fallthru
          _
        // Predicated region
        $region61: #{tpu_custom_call.1} parent=11 // pred_check
          %p481 = pneg %p329
        $region62: #{tpu_custom_call.1} parent=11 // pred_check_branch
          %483 = sbr.rel (%p481) target = $region64
        $region63: #{tpu_custom_call.1} parent=11 // pred_region
          _
        $region64: #{tpu_custom_call.1} parent=11 // pred_fallthru
          _
        // Predicated region
        $region65: #{tpu_custom_call.1} parent=11 // pred_check
          %p484 = pneg %p350
        $region66: #{tpu_custom_call.1} parent=11 // pred_check_branch
          %486 = sbr.rel (%p484) target = $region68
        $region67: #{tpu_custom_call.1} parent=11 // pred_region
          _
        $region68: #{tpu_custom_call.1} parent=11 // pred_fallthru
          _
      $region12: #{tpu_custom_call.1} parent=5 // pred_fallthru
        _
      %p487 = scmp.lt.s32.totalorder %s30, 2
      // Predicated region
      $region69: #{tpu_custom_call.1} parent=5 // pred_check
        %p488 = pneg %p487
      $region70: #{tpu_custom_call.1} parent=5 // pred_check_branch
        %490 = sbr.rel (%p488) target = $region72
      $region71: #{tpu_custom_call.1} parent=5 // pred_region
        // Predicated region
        $region73: #{tpu_custom_call.1} parent=71 // pred_check
          %p491 = pneg %p50
        $region74: #{tpu_custom_call.1} parent=71 // pred_check_branch
          %493 = sbr.rel (%p491) target = $region76
        $region75: #{tpu_custom_call.1} parent=71 // pred_region
          %p494 = scmp.lt.s32.totalorder %s30, 1
          %s495 = scalar_select %p494, %s30, 1
          %s496 = smul.addr %s495, 8
          %s497 = scalar_lea.vmem %s0, %s496
        $region76: #{tpu_custom_call.1} parent=71 // pred_fallthru
          _
      $region72: #{tpu_custom_call.1} parent=5 // pred_fallthru
        _
      %p498 = scmp.le.s32.totalorder 1, %s30
      %p499 = scmp.lt.s32.totalorder %s30, 3
      %p500 = pnand %p498, %p499
      %p501 = pneg %p500
      // Predicated region
      $region77: #{tpu_custom_call.1} parent=5 // pred_check
        _
      $region78: #{tpu_custom_call.1} parent=5 // pred_check_branch
        %503 = sbr.rel (%p500) target = $region80
      $region79: #{tpu_custom_call.1} parent=5 // pred_region
        %s504 = ssub.s32 %s30, 1
        // Predicated region
        $region81: #{tpu_custom_call.1} parent=79 // pred_check
          %p505 = pneg %p77
        $region82: #{tpu_custom_call.1} parent=79 // pred_check_branch
          %507 = sbr.rel (%p505) target = $region84
        $region83: #{tpu_custom_call.1} parent=79 // pred_region
          %508 = dma.done [#allocation4], 64
        $region84: #{tpu_custom_call.1} parent=79 // pred_fallthru
          _
        // Predicated region
        $region85: #{tpu_custom_call.1} parent=79 // pred_check
          %p509 = pneg %p161
        $region86: #{tpu_custom_call.1} parent=79 // pred_check_branch
          %511 = sbr.rel (%p509) target = $region88
        $region87: #{tpu_custom_call.1} parent=79 // pred_region
          %512 = dma.done [#allocation7], 256
        $region88: #{tpu_custom_call.1} parent=79 // pred_fallthru
          _
        // Predicated region
        $region89: #{tpu_custom_call.1} parent=79 // pred_check
          %p513 = pneg %p203
        $region90: #{tpu_custom_call.1} parent=79 // pred_check_branch
          %515 = sbr.rel (%p513) target = $region92
        $region91: #{tpu_custom_call.1} parent=79 // pred_region
          %516 = dma.done [#allocation7], 256
        $region92: #{tpu_custom_call.1} parent=79 // pred_fallthru
          _
        // Predicated region
        $region93: #{tpu_custom_call.1} parent=79 // pred_check
          %p517 = pneg %p224
        $region94: #{tpu_custom_call.1} parent=79 // pred_check_branch
          %519 = sbr.rel (%p517) target = $region96
        $region95: #{tpu_custom_call.1} parent=79 // pred_region
          %520 = dma.done [#allocation10], 16
        $region96: #{tpu_custom_call.1} parent=79 // pred_fallthru
          _
        // Predicated region
        $region97: #{tpu_custom_call.1} parent=79 // pred_check
          %p521 = pneg %p245
        $region98: #{tpu_custom_call.1} parent=79 // pred_check_branch
          %523 = sbr.rel (%p521) target = $region100
        $region99: #{tpu_custom_call.1} parent=79 // pred_region
          %524 = dma.done [#allocation10], 256
        $region100: #{tpu_custom_call.1} parent=79 // pred_fallthru
          _
        // Predicated region
        $region101: #{tpu_custom_call.1} parent=79 // pred_check
          %p525 = pneg %p266
        $region102: #{tpu_custom_call.1} parent=79 // pred_check_branch
          %527 = sbr.rel (%p525) target = $region104
        $region103: #{tpu_custom_call.1} parent=79 // pred_region
          %528 = dma.done [#allocation13], 16
        $region104: #{tpu_custom_call.1} parent=79 // pred_fallthru
          _
        %p529 = scmp.lt.s32.totalorder %s35, 1
        %s530 = scalar_select %p529, %s35, 1
        %s531 = smul.addr %s530, 8
        %s532 = scalar_lea.vmem %s0, %s531
        %p533 = pneg %p56
        %p534 = pneg %p53
        %p535 = pneg %p77
        %p536 = pneg %p74
        %p537 = pneg %p98
        %p538 = pneg %p95
        %p539 = pneg %p119
        %p540 = pneg %p116
        %p541 = pneg %p140
        %p542 = pneg %p137
        %p543 = pneg %p161
        %p544 = pneg %p158
        %p545 = pneg %p182
        %p546 = pneg %p179
        %p547 = pneg %p203
        %p548 = pneg %p200
        %p549 = pneg %p224
        %p550 = pneg %p221
        %p551 = pneg %p245
        %p552 = pneg %p242
        %p553 = pneg %p266
        %p554 = pneg %p263
        %p555 = pneg %p287
        %p556 = pneg %p284
        %p557 = pneg %p308
        %p558 = pneg %p305
        %p559 = pneg %p329
        %p560 = pneg %p326
        %p561 = pneg %p350
        %p562 = pneg %p347
        %p563 = pneg %p376
        %p564 = pneg %p373
        %s565 = sand.u32 %s363, 1
        %s566 = scalar_lea.sflag [#allocation5], %s565
        %s567 = sand.u32 %s363, 1
        %s568 = scalar_lea.vmem [#allocation14], %s567
        %p569 = scmp.lt.s32.totalorder %s35, 1
        %s570 = scalar_select %p569, %s35, 1
        %s571 = smul.addr %s570, 8
        %s572 = scalar_lea.vmem %s0, %s571
        %v574 = vld [vmem:[%s572] sm:$0xff]
        %v575 = vpack.c.bf16 %v574, %v574
        %v576 = vld [vmem:[#allocation3] sm:$0xf]
        %v577 = vld [vmem:[%s2] sm:$0x1]
        %v579 = vlaneseq
        %v580 = vshrl.u32 %v579, 7
        %v581 = vsub.s32 0, %v580
        %v582 = vrot.slane %v577, %v581
        %vm584 = vcmask 64512
        %v586 = vsel %vm584, %v575, 0
        %vm588 = vcmask 1043456
        %v590 = vsel %vm588, %v576, 0
        %592 = vmatprep.subr.bf16.mxu0 0
        %593 = vmatpush1.bf16.msra.mxu0 %v590
        %594 = vmatprep.subr.bf16.mxu0 0
        %595 = vmatpush1.bf16.msra.mxu0 0
        %596 = vmatprep.subr.bf16.mxu0 0
        %597 = vmatpush1.bf16.msra.mxu0 0
        %598 = vmatprep.subr.bf16.mxu0 0
        %599 = vmatpush1.bf16.msra.mxu0 0
        %600 = vmatprep.subr.bf16.mxu0 0
        %601 = vmatpush1.bf16.msra.mxu0 0
        %602 = vmatprep.subr.bf16.mxu0 0
        %603 = vmatpush1.bf16.msra.mxu0 0
        %604 = vmatprep.subr.bf16.mxu0 0
        %605 = vmatpush1.bf16.msra.mxu0 0
        %606 = vmatprep.subr.bf16.mxu0 0
        %607 = vmatpush1.bf16.msra.mxu0 0
        %608 = vmatprep.subr.bf16.mxu0 0
        %609 = vmatpush1.bf16.msra.mxu0 0
        %610 = vmatprep.subr.bf16.mxu0 0
        %611 = vmatpush1.bf16.msra.mxu0 0
        %612 = vmatprep.subr.bf16.mxu0 0
        %613 = vmatpush1.bf16.msra.mxu0 0
        %614 = vmatprep.subr.bf16.mxu0 0
        %615 = vmatpush1.bf16.msra.mxu0 0
        %616 = vmatprep.subr.bf16.mxu0 0
        %617 = vmatpush1.bf16.msra.mxu0 0
        %618 = vmatprep.subr.bf16.mxu0 0
        %619 = vmatpush1.bf16.msra.mxu0 0
        %620 = vmatprep.subr.bf16.mxu0 0
        %621 = vmatpush1.bf16.msra.mxu0 0
        %622 = vmatprep.subr.bf16.mxu0 0
        %623 = vmatpush1.bf16.msra.mxu0 0
        %624 = vmatprep.mubr.bf16.mxu0 0
        %625 = vmatmul.mubr.bf16.gmra.mrb[0].mxu0 %v586
        %v626 = vpop.f32.mrb[0].mxu0
        %v627 = vadd.f32 %v582, %v626
        %v628 = vpop.f32.mrb[0].mxu0
        %v629 = vpop.f32.mrb[0].mxu0
        %v630 = vpop.f32.mrb[0].mxu0
        %631 = vdwg.mxu0
        %v632 = vmax.f32 %v627, 0.0
        %v633 = vpack.c.bf16 %v632, %v632
        %v634 = vld [vmem:[%s3] sm:$0xf]
        %v635 = vld [vmem:[%s3 + $0x4] sm:$0xf]
        %v636 = vld [vmem:[%s3 + $0x8] sm:$0xf]
        %v637 = vld [vmem:[%s3 + $0xc] sm:$0xf]
        %v642 = vunpack.c.l.b16 %v634
        %v643 = vunpack.c.l.b16 %v635
        %v644 = vunpack.c.l.b16 %v636
        %v645 = vunpack.c.l.b16 %v637
        %v646 = vpack.c.b16 %v643, %v642
        %v647 = vpack.c.b16 %v645, %v644
        %vm650 = vcmask 261120
        %v652 = vsel %vm650, %v633, 0
        %654 = vmatprep.subr.bf16.mxu0 0
        %655 = vmatpush1.bf16.msra.mxu0 %v646
        %656 = vmatprep.subr.bf16.mxu0 0
        %657 = vmatpush1.bf16.msra.mxu0 %v647
        %658 = vmatprep.subr.bf16.mxu0 0
        %659 = vmatpush1.bf16.msra.mxu0 0
        %660 = vmatprep.subr.bf16.mxu0 0
        %661 = vmatpush1.bf16.msra.mxu0 0
        %662 = vmatprep.subr.bf16.mxu0 0
        %663 = vmatpush1.bf16.msra.mxu0 0
        %664 = vmatprep.subr.bf16.mxu0 0
        %665 = vmatpush1.bf16.msra.mxu0 0
        %666 = vmatprep.subr.bf16.mxu0 0
        %667 = vmatpush1.bf16.msra.mxu0 0
        %668 = vmatprep.subr.bf16.mxu0 0
        %669 = vmatpush1.bf16.msra.mxu0 0
        %670 = vmatprep.subr.bf16.mxu0 0
        %671 = vmatpush1.bf16.msra.mxu0 0
        %672 = vmatprep.subr.bf16.mxu0 0
        %673 = vmatpush1.bf16.msra.mxu0 0
        %674 = vmatprep.subr.bf16.mxu0 0
        %675 = vmatpush1.bf16.msra.mxu0 0
        %676 = vmatprep.subr.bf16.mxu0 0
        %677 = vmatpush1.bf16.msra.mxu0 0
        %678 = vmatprep.subr.bf16.mxu0 0
        %679 = vmatpush1.bf16.msra.mxu0 0
        %680 = vmatprep.subr.bf16.mxu0 0
        %681 = vmatpush1.bf16.msra.mxu0 0
        %682 = vmatprep.subr.bf16.mxu0 0
        %683 = vmatpush1.bf16.msra.mxu0 0
        %684 = vmatprep.subr.bf16.mxu0 0
        %685 = vmatpush1.bf16.msra.mxu0 0
        %686 = vmatprep.mubr.bf16.mxu0 0
        %687 = vmatmul.mubr.bf16.gmra.mrb[0].mxu0 %v652
        %v688 = vpop.f32.mrb[0].mxu0
        %v689 = vadd.f32 0.0, %v688
        %v690 = vpop.f32.mrb[0].mxu0
        %v691 = vpop.f32.mrb[0].mxu0
        %v692 = vpop.f32.mrb[0].mxu0
        %693 = vdwg.mxu0
        %v694 = vld [vmem:[%s4] sm:$0xf]
        %v695 = vld [vmem:[%s4 + $0x4] sm:$0xf]
        %v696 = vld [vmem:[%s4 + $0x8] sm:$0xf]
        %v697 = vld [vmem:[%s4 + $0xc] sm:$0xf]
        %v702 = vunpack.c.l.b16 %v694
        %v703 = vunpack.c.l.b16 %v695
        %v704 = vunpack.c.l.b16 %v696
        %v705 = vunpack.c.l.b16 %v697
        %v706 = vpack.c.b16 %v703, %v702
        %v707 = vpack.c.b16 %v705, %v704
        %710 = vmatprep.subr.bf16.mxu0 0
        %711 = vmatpush1.bf16.msra.mxu0 %v706
        %712 = vmatprep.subr.bf16.mxu0 0
        %713 = vmatpush1.bf16.msra.mxu0 %v707
        %714 = vmatprep.subr.bf16.mxu0 0
        %715 = vmatpush1.bf16.msra.mxu0 0
        %716 = vmatprep.subr.bf16.mxu0 0
        %717 = vmatpush1.bf16.msra.mxu0 0
        %718 = vmatprep.subr.bf16.mxu0 0
        %719 = vmatpush1.bf16.msra.mxu0 0
        %720 = vmatprep.subr.bf16.mxu0 0
        %721 = vmatpush1.bf16.msra.mxu0 0
        %722 = vmatprep.subr.bf16.mxu0 0
        %723 = vmatpush1.bf16.msra.mxu0 0
        %724 = vmatprep.subr.bf16.mxu0 0
        %725 = vmatpush1.bf16.msra.mxu0 0
        %726 = vmatprep.subr.bf16.mxu0 0
        %727 = vmatpush1.bf16.msra.mxu0 0
        %728 = vmatprep.subr.bf16.mxu0 0
        %729 = vmatpush1.bf16.msra.mxu0 0
        %730 = vmatprep.subr.bf16.mxu0 0
        %731 = vmatpush1.bf16.msra.mxu0 0
        %732 = vmatprep.subr.bf16.mxu0 0
        %733 = vmatpush1.bf16.msra.mxu0 0
        %734 = vmatprep.subr.bf16.mxu0 0
        %735 = vmatpush1.bf16.msra.mxu0 0
        %736 = vmatprep.subr.bf16.mxu0 0
        %737 = vmatpush1.bf16.msra.mxu0 0
        %738 = vmatprep.subr.bf16.mxu0 0
        %739 = vmatpush1.bf16.msra.mxu0 0
        %740 = vmatprep.subr.bf16.mxu0 0
        %741 = vmatpush1.bf16.msra.mxu0 0
        %742 = vmatprep.mubr.bf16.mxu0 0
        %743 = vmatmul.mubr.bf16.gmra.mrb[0].mxu0 %v652
        %v744 = vpop.f32.mrb[0].mxu0
        %v745 = vadd.f32 0.0, %v744
        %v746 = vpop.f32.mrb[0].mxu0
        %v747 = vpop.f32.mrb[0].mxu0
        %v748 = vpop.f32.mrb[0].mxu0
        %749 = vdwg.mxu0
        %v750 = vld [vmem:[#allocation6] sm:$0xf]
        %v751 = vld [vmem:[#allocation6 + $0x4] sm:$0xf]
        %v752 = vld [vmem:[#allocation6 + $0x8] sm:$0xf]
        %v753 = vld [vmem:[#allocation6 + $0xc] sm:$0xf]
        %v758 = vunpack.c.l.b16 %v750
        %v759 = vunpack.c.l.b16 %v751
        %v760 = vunpack.c.l.b16 %v752
        %v761 = vunpack.c.l.b16 %v753
        %v762 = vpack.c.b16 %v759, %v758
        %v763 = vpack.c.b16 %v761, %v760
        %766 = vmatprep.subr.bf16.mxu0 0
        %767 = vmatpush1.bf16.msra.mxu0 %v762
        %768 = vmatprep.subr.bf16.mxu0 0
        %769 = vmatpush1.bf16.msra.mxu0 %v763
        %770 = vmatprep.subr.bf16.mxu0 0
        %771 = vmatpush1.bf16.msra.mxu0 0
        %772 = vmatprep.subr.bf16.mxu0 0
        %773 = vmatpush1.bf16.msra.mxu0 0
        %774 = vmatprep.subr.bf16.mxu0 0
        %775 = vmatpush1.bf16.msra.mxu0 0
        %776 = vmatprep.subr.bf16.mxu0 0
        %777 = vmatpush1.bf16.msra.mxu0 0
        %778 = vmatprep.subr.bf16.mxu0 0
        %779 = vmatpush1.bf16.msra.mxu0 0
        %780 = vmatprep.subr.bf16.mxu0 0
        %781 = vmatpush1.bf16.msra.mxu0 0
        %782 = vmatprep.subr.bf16.mxu0 0
        %783 = vmatpush1.bf16.msra.mxu0 0
        %784 = vmatprep.subr.bf16.mxu0 0
        %785 = vmatpush1.bf16.msra.mxu0 0
        %786 = vmatprep.subr.bf16.mxu0 0
        %787 = vmatpush1.bf16.msra.mxu0 0
        %788 = vmatprep.subr.bf16.mxu0 0
        %789 = vmatpush1.bf16.msra.mxu0 0
        %790 = vmatprep.subr.bf16.mxu0 0
        %791 = vmatpush1.bf16.msra.mxu0 0
        %792 = vmatprep.subr.bf16.mxu0 0
        %793 = vmatpush1.bf16.msra.mxu0 0
        %794 = vmatprep.subr.bf16.mxu0 0
        %795 = vmatpush1.bf16.msra.mxu0 0
        %796 = vmatprep.subr.bf16.mxu0 0
        %797 = vmatpush1.bf16.msra.mxu0 0
        %798 = vmatprep.mubr.bf16.mxu0 0
        %799 = vmatmul.mubr.bf16.gmra.mrb[0].mxu0 %v652
        %v800 = vpop.f32.mrb[0].mxu0
        %v801 = vadd.f32 0.0, %v800
        %v802 = vpop.f32.mrb[0].mxu0
        %v803 = vpop.f32.mrb[0].mxu0
        %v804 = vpop.f32.mrb[0].mxu0
        %805 = vdwg.mxu0
        %v807 = vsel %vm650, %v689, 0
        %v810 = vsel %vm650, %v745, 0
        %812 = vmatprep.subr.mxu0 0.0
        %813 = vmatpush1.xpose.msra.mxu0 %v810
        %814 = vmatprep.subr.mxu0 0.0
        %815 = vmatpush1.xpose.msra.mxu0 0.0
        %816 = vmatprep.subr.mxu0 0.0
        %817 = vmatpush1.xpose.msra.mxu0 0.0
        %818 = vmatprep.subr.mxu0 0.0
        %819 = vmatpush1.xpose.msra.mxu0 0.0
        %820 = vmatprep.subr.mxu0 0.0
        %821 = vmatpush1.xpose.msra.mxu0 0.0
        %822 = vmatprep.subr.mxu0 0.0
        %823 = vmatpush1.xpose.msra.mxu0 0.0
        %824 = vmatprep.subr.mxu0 0.0
        %825 = vmatpush1.xpose.msra.mxu0 0.0
        %826 = vmatprep.subr.mxu0 0.0
        %827 = vmatpush1.xpose.msra.mxu0 0.0
        %828 = vmatprep.subr.mxu0 0.0
        %829 = vmatpush1.xpose.msra.mxu0 0.0
        %830 = vmatprep.subr.mxu0 0.0
        %831 = vmatpush1.xpose.msra.mxu0 0.0
        %832 = vmatprep.subr.mxu0 0.0
        %833 = vmatpush1.xpose.msra.mxu0 0.0
        %834 = vmatprep.subr.mxu0 0.0
        %835 = vmatpush1.xpose.msra.mxu0 0.0
        %836 = vmatprep.subr.mxu0 0.0
        %837 = vmatpush1.xpose.msra.mxu0 0.0
        %838 = vmatprep.subr.mxu0 0.0
        %839 = vmatpush1.xpose.msra.mxu0 0.0
        %840 = vmatprep.subr.mxu0 0.0
        %841 = vmatpush1.xpose.msra.mxu0 0.0
        %842 = vmatprep.subr.mxu0 0.0
        %843 = vmatpush1.xpose.msra.mxu0 0.0
        %844 = vmatprep.subr.mxu0 0.0
        %845 = vmatpush1.xpose.msra.mxu0 0.0
        %846 = vmatprep.subr.mxu0 0.0
        %847 = vmatpush1.xpose.msra.mxu0 0.0
        %848 = vmatprep.subr.mxu0 0.0
        %849 = vmatpush1.xpose.msra.mxu0 0.0
        %850 = vmatprep.subr.mxu0 0.0
        %851 = vmatpush1.xpose.msra.mxu0 0.0
        %852 = vmatprep.subr.mxu0 0.0
        %853 = vmatpush1.xpose.msra.mxu0 0.0
        %854 = vmatprep.subr.mxu0 0.0
        %855 = vmatpush1.xpose.msra.mxu0 0.0
        %856 = vmatprep.subr.mxu0 0.0
        %857 = vmatpush1.xpose.msra.mxu0 0.0
        %858 = vmatprep.subr.mxu0 0.0
        %859 = vmatpush1.xpose.msra.mxu0 0.0
        %860 = vmatprep.subr.mxu0 0.0
        %861 = vmatpush1.xpose.msra.mxu0 0.0
        %862 = vmatprep.subr.mxu0 0.0
        %863 = vmatpush1.xpose.msra.mxu0 0.0
        %864 = vmatprep.subr.mxu0 0.0
        %865 = vmatpush1.xpose.msra.mxu0 0.0
        %866 = vmatprep.subr.mxu0 0.0
        %867 = vmatpush1.xpose.msra.mxu0 0.0
        %868 = vmatprep.subr.mxu0 0.0
        %869 = vmatpush1.xpose.msra.mxu0 0.0
        %870 = vmatprep.subr.mxu0 0.0
        %871 = vmatpush1.xpose.msra.mxu0 0.0
        %872 = vmatprep.subr.mxu0 0.0
        %873 = vmatpush1.xpose.msra.mxu0 0.0
        %874 = vmatprep.subr.mxu0 0.0
        %875 = vmatpush1.xpose.msra.mxu0 0.0
        %876 = vmatprep.mubr.f32.mxu0 0.0
        %877 = vmatmul.mubr.f32.gmra.mrb[0].mxu0 %v807
        %v878 = vpop.f32.mrb[0].mxu0
        %v879 = vadd.f32 0.0, %v878
        %v880 = vpop.f32.mrb[0].mxu0
        %881 = vdwg.mxu0
        %v882 = vmul.f32 %v879, 0.17677669
        %v883 = vsel %vm584, %v882, -inf
        %884 = vmax.xlane.f32.xlu0 %v883
        %v885 = vpop.xlane.xlu0 %884
        %v886 = vsub.f32 %v882, %v885
        %v887 = vmul.f32 %v886, 1.442695
        %v888 = vpow.pop %v887
        %v889 = vsel %vm584, %v888, 0.0
        %890 = vadd.xlane.f32.xlu0 %v889
        %v891 = vpop.xlane.xlu0 %890
        %v892 = vrcp.pop %v891
        %v893 = vmul.f32 %v888, %v892
        %v895 = vsel %vm584, %v893, 0
        %897 = vmatprep.subr.mxu0 0.0
        %898 = vmatpush1.msra.mxu0 %v801
        %899 = vmatprep.subr.mxu0 0.0
        %900 = vmatpush1.msra.mxu0 0.0
        %901 = vmatprep.subr.mxu0 0.0
        %902 = vmatpush1.msra.mxu0 0.0
        %903 = vmatprep.subr.mxu0 0.0
        %904 = vmatpush1.msra.mxu0 0.0
        %905 = vmatprep.subr.mxu0 0.0
        %906 = vmatpush1.msra.mxu0 0.0
        %907 = vmatprep.subr.mxu0 0.0
        %908 = vmatpush1.msra.mxu0 0.0
        %909 = vmatprep.subr.mxu0 0.0
        %910 = vmatpush1.msra.mxu0 0.0
        %911 = vmatprep.subr.mxu0 0.0
        %912 = vmatpush1.msra.mxu0 0.0
        %913 = vmatprep.subr.mxu0 0.0
        %914 = vmatpush1.msra.mxu0 0.0
        %915 = vmatprep.subr.mxu0 0.0
        %916 = vmatpush1.msra.mxu0 0.0
        %917 = vmatprep.subr.mxu0 0.0
        %918 = vmatpush1.msra.mxu0 0.0
        %919 = vmatprep.subr.mxu0 0.0
        %920 = vmatpush1.msra.mxu0 0.0
        %921 = vmatprep.subr.mxu0 0.0
        %922 = vmatpush1.msra.mxu0 0.0
        %923 = vmatprep.subr.mxu0 0.0
        %924 = vmatpush1.msra.mxu0 0.0
        %925 = vmatprep.subr.mxu0 0.0
        %926 = vmatpush1.msra.mxu0 0.0
        %927 = vmatprep.subr.mxu0 0.0
        %928 = vmatpush1.msra.mxu0 0.0
        %929 = vmatprep.subr.mxu0 0.0
        %930 = vmatpush1.msra.mxu0 0.0
        %931 = vmatprep.subr.mxu0 0.0
        %932 = vmatpush1.msra.mxu0 0.0
        %933 = vmatprep.subr.mxu0 0.0
        %934 = vmatpush1.msra.mxu0 0.0
        %935 = vmatprep.subr.mxu0 0.0
        %936 = vmatpush1.msra.mxu0 0.0
        %937 = vmatprep.subr.mxu0 0.0
        %938 = vmatpush1.msra.mxu0 0.0
        %939 = vmatprep.subr.mxu0 0.0
        %940 = vmatpush1.msra.mxu0 0.0
        %941 = vmatprep.subr.mxu0 0.0
        %942 = vmatpush1.msra.mxu0 0.0
        %943 = vmatprep.subr.mxu0 0.0
        %944 = vmatpush1.msra.mxu0 0.0
        %945 = vmatprep.subr.mxu0 0.0
        %946 = vmatpush1.msra.mxu0 0.0
        %947 = vmatprep.subr.mxu0 0.0
        %948 = vmatpush1.msra.mxu0 0.0
        %949 = vmatprep.subr.mxu0 0.0
        %950 = vmatpush1.msra.mxu0 0.0
        %951 = vmatprep.subr.mxu0 0.0
        %952 = vmatpush1.msra.mxu0 0.0
        %953 = vmatprep.subr.mxu0 0.0
        %954 = vmatpush1.msra.mxu0 0.0
        %955 = vmatprep.subr.mxu0 0.0
        %956 = vmatpush1.msra.mxu0 0.0
        %957 = vmatprep.subr.mxu0 0.0
        %958 = vmatpush1.msra.mxu0 0.0
        %959 = vmatprep.subr.mxu0 0.0
        %960 = vmatpush1.msra.mxu0 0.0
        %961 = vmatprep.mubr.f32.mxu0 0.0
        %962 = vmatmul.mubr.f32.gmra.mrb[0].mxu0 %v895
        %v963 = vpop.f32.mrb[0].mxu0
        %v964 = vadd.f32 0.0, %v963
        %v965 = vpop.f32.mrb[0].mxu0
        %966 = vdwg.mxu0
        %v967 = vpack.c.bf16 %v964, %v964
        %v968 = vld [vmem:[%s6] sm:$0xf]
        %v969 = vld [vmem:[%s6 + $0x4] sm:$0xf]
        %v970 = vld [vmem:[%s6 + $0x8] sm:$0xf]
        %v971 = vld [vmem:[%s6 + $0xc] sm:$0xf]
        %v976 = vunpack.c.l.b16 %v968
        %v977 = vunpack.c.l.b16 %v969
        %v978 = vunpack.c.l.b16 %v970
        %v979 = vunpack.c.l.b16 %v971
        %v980 = vpack.c.b16 %v977, %v976
        %v981 = vpack.c.b16 %v979, %v978
        %v985 = vsel %vm650, %v967, 0
        %987 = vmatprep.subr.bf16.mxu0 0
        %988 = vmatpush1.bf16.msra.mxu0 %v980
        %989 = vmatprep.subr.bf16.mxu0 0
        %990 = vmatpush1.bf16.msra.mxu0 %v981
        %991 = vmatprep.subr.bf16.mxu0 0
        %992 = vmatpush1.bf16.msra.mxu0 0
        %993 = vmatprep.subr.bf16.mxu0 0
        %994 = vmatpush1.bf16.msra.mxu0 0
        %995 = vmatprep.subr.bf16.mxu0 0
        %996 = vmatpush1.bf16.msra.mxu0 0
        %997 = vmatprep.subr.bf16.mxu0 0
        %998 = vmatpush1.bf16.msra.mxu0 0
        %999 = vmatprep.subr.bf16.mxu0 0
        %1000 = vmatpush1.bf16.msra.mxu0 0
        %1001 = vmatprep.subr.bf16.mxu0 0
        %1002 = vmatpush1.bf16.msra.mxu0 0
        %1003 = vmatprep.subr.bf16.mxu0 0
        %1004 = vmatpush1.bf16.msra.mxu0 0
        %1005 = vmatprep.subr.bf16.mxu0 0
        %1006 = vmatpush1.bf16.msra.mxu0 0
        %1007 = vmatprep.subr.bf16.mxu0 0
        %1008 = vmatpush1.bf16.msra.mxu0 0
        %1009 = vmatprep.subr.bf16.mxu0 0
        %1010 = vmatpush1.bf16.msra.mxu0 0
        %1011 = vmatprep.subr.bf16.mxu0 0
        %1012 = vmatpush1.bf16.msra.mxu0 0
        %1013 = vmatprep.subr.bf16.mxu0 0
        %1014 = vmatpush1.bf16.msra.mxu0 0
        %1015 = vmatprep.subr.bf16.mxu0 0
        %1016 = vmatpush1.bf16.msra.mxu0 0
        %1017 = vmatprep.subr.bf16.mxu0 0
        %1018 = vmatpush1.bf16.msra.mxu0 0
        %1019 = vmatprep.mubr.bf16.mxu0 0
        %1020 = vmatmul.mubr.bf16.gmra.mrb[0].mxu0 %v985
        %v1021 = vpop.f32.mrb[0].mxu0
        %v1022 = vadd.f32 %v632, %v1021
        %v1023 = vpop.f32.mrb[0].mxu0
        %v1024 = vpop.f32.mrb[0].mxu0
        %v1025 = vpop.f32.mrb[0].mxu0
        %1026 = vdwg.mxu0
        %v1027 = vsel %vm650, %v1022, 0.0
        %1028 = vadd.xlane.f32.xlu0 %v1027
        %v1029 = vpop.xlane.xlu0 %1028
        %v1030 = vrcp.pop 32.0
        %v1031 = vmul.f32 %v1029, %v1030
        %v1032 = vsub.f32 %v1022, %v1031
        %v1033 = vmul.f32 %v1032, %v1032
        %v1034 = vsel %vm650, %v1033, 0.0
        %1035 = vadd.xlane.f32.xlu0 %v1034
        %v1036 = vpop.xlane.xlu0 %1035
        %v1037 = vmul.f32 %v1036, %v1030
        %v1038 = vadd.f32 %v1037, 1e-05
        %v1039 = vrsqrt.pop %v1038
        %v1040 = vmul.f32 %v1032, %v1039
        %v1041 = vpack.c.bf16 %v1040, %v1040
        %v1042 = vld [vmem:[#allocation8] sm:$0xf]
        %v1043 = vld [vmem:[#allocation8 + $0x4] sm:$0xf]
        %v1044 = vld [vmem:[#allocation8 + $0x8] sm:$0xf]
        %v1045 = vld [vmem:[#allocation8 + $0xc] sm:$0xf]
        %v1046 = vld [vmem:[#allocation9] sm:$0x1]
        %v1048 = vlaneseq
        %v1049 = vshrl.u32 %v1048, 7
        %v1050 = vsub.s32 0, %v1049
        %v1051 = vrot.slane %v1046, %v1050
        %v1057 = vunpack.c.l.b16 %v1042
        %v1058 = vunpack.c.l.b16 %v1043
        %v1059 = vunpack.c.l.b16 %v1044
        %v1060 = vunpack.c.l.b16 %v1045
        %v1061 = vpack.c.b16 %v1058, %v1057
        %v1062 = vpack.c.b16 %v1060, %v1059
        %v1066 = vsel %vm650, %v1041, 0
        %1068 = vmatprep.subr.bf16.mxu0 0
        %1069 = vmatpush1.bf16.msra.mxu0 %v1061
        %1070 = vmatprep.subr.bf16.mxu0 0
        %1071 = vmatpush1.bf16.msra.mxu0 %v1062
        %1072 = vmatprep.subr.bf16.mxu0 0
        %1073 = vmatpush1.bf16.msra.mxu0 0
        %1074 = vmatprep.subr.bf16.mxu0 0
        %1075 = vmatpush1.bf16.msra.mxu0 0
        %1076 = vmatprep.subr.bf16.mxu0 0
        %1077 = vmatpush1.bf16.msra.mxu0 0
        %1078 = vmatprep.subr.bf16.mxu0 0
        %1079 = vmatpush1.bf16.msra.mxu0 0
        %1080 = vmatprep.subr.bf16.mxu0 0
        %1081 = vmatpush1.bf16.msra.mxu0 0
        %1082 = vmatprep.subr.bf16.mxu0 0
        %1083 = vmatpush1.bf16.msra.mxu0 0
        %1084 = vmatprep.subr.bf16.mxu0 0
        %1085 = vmatpush1.bf16.msra.mxu0 0
        %1086 = vmatprep.subr.bf16.mxu0 0
        %1087 = vmatpush1.bf16.msra.mxu0 0
        %1088 = vmatprep.subr.bf16.mxu0 0
        %1089 = vmatpush1.bf16.msra.mxu0 0
        %1090 = vmatprep.subr.bf16.mxu0 0
        %1091 = vmatpush1.bf16.msra.mxu0 0
        %1092 = vmatprep.subr.bf16.mxu0 0
        %1093 = vmatpush1.bf16.msra.mxu0 0
        %1094 = vmatprep.subr.bf16.mxu0 0
        %1095 = vmatpush1.bf16.msra.mxu0 0
        %1096 = vmatprep.subr.bf16.mxu0 0
        %1097 = vmatpush1.bf16.msra.mxu0 0
        %1098 = vmatprep.subr.bf16.mxu0 0
        %1099 = vmatpush1.bf16.msra.mxu0 0
        %1100 = vmatprep.mubr.bf16.mxu0 0
        %1101 = vmatmul.mubr.bf16.gmra.mrb[0].mxu0 %v1066
        %v1102 = vpop.f32.mrb[0].mxu0
        %v1103 = vadd.f32 %v1051, %v1102
        %v1104 = vpop.f32.mrb[0].mxu0
        %v1105 = vpop.f32.mrb[0].mxu0
        %v1106 = vpop.f32.mrb[0].mxu0
        %1107 = vdwg.mxu0
        %v1108 = vadd.f32 %v1103, 3.0
        %v1109 = vmax.f32 %v1108, 0.0
        %v1110 = vmin.f32 %v1109, 6.0
        %v1111 = vmul.f32 %v1103, %v1110
        %v1112 = vmul.f32 %v1111, 0.16666667
        %v1113 = vpack.c.bf16 %v1112, %v1112
        %v1114 = vld [vmem:[#allocation11] sm:$0xf]
        %v1115 = vld [vmem:[#allocation11 + $0x4] sm:$0xf]
        %v1116 = vld [vmem:[#allocation11 + $0x8] sm:$0xf]
        %v1117 = vld [vmem:[#allocation11 + $0xc] sm:$0xf]
        %v1118 = vld [vmem:[#allocation12] sm:$0x1]
        %v1120 = vlaneseq
        %v1121 = vshrl.u32 %v1120, 7
        %v1122 = vsub.s32 0, %v1121
        %v1123 = vrot.slane %v1118, %v1122
        %v1129 = vunpack.c.l.b16 %v1114
        %v1130 = vunpack.c.l.b16 %v1115
        %v1131 = vunpack.c.l.b16 %v1116
        %v1132 = vunpack.c.l.b16 %v1117
        %v1133 = vpack.c.b16 %v1130, %v1129
        %v1134 = vpack.c.b16 %v1132, %v1131
        %v1138 = vsel %vm650, %v1113, 0
        %1140 = vmatprep.subr.bf16.mxu0 0
        %1141 = vmatpush1.bf16.msra.mxu0 %v1133
        %1142 = vmatprep.subr.bf16.mxu0 0
        %1143 = vmatpush1.bf16.msra.mxu0 %v1134
        %1144 = vmatprep.subr.bf16.mxu0 0
        %1145 = vmatpush1.bf16.msra.mxu0 0
        %1146 = vmatprep.subr.bf16.mxu0 0
        %1147 = vmatpush1.bf16.msra.mxu0 0
        %1148 = vmatprep.subr.bf16.mxu0 0
        %1149 = vmatpush1.bf16.msra.mxu0 0
        %1150 = vmatprep.subr.bf16.mxu0 0
        %1151 = vmatpush1.bf16.msra.mxu0 0
        %1152 = vmatprep.subr.bf16.mxu0 0
        %1153 = vmatpush1.bf16.msra.mxu0 0
        %1154 = vmatprep.subr.bf16.mxu0 0
        %1155 = vmatpush1.bf16.msra.mxu0 0
        %1156 = vmatprep.subr.bf16.mxu0 0
        %1157 = vmatpush1.bf16.msra.mxu0 0
        %1158 = vmatprep.subr.bf16.mxu0 0
        %1159 = vmatpush1.bf16.msra.mxu0 0
        %1160 = vmatprep.subr.bf16.mxu0 0
        %1161 = vmatpush1.bf16.msra.mxu0 0
        %1162 = vmatprep.subr.bf16.mxu0 0
        %1163 = vmatpush1.bf16.msra.mxu0 0
        %1164 = vmatprep.subr.bf16.mxu0 0
        %1165 = vmatpush1.bf16.msra.mxu0 0
        %1166 = vmatprep.subr.bf16.mxu0 0
        %1167 = vmatpush1.bf16.msra.mxu0 0
        %1168 = vmatprep.subr.bf16.mxu0 0
        %1169 = vmatpush1.bf16.msra.mxu0 0
        %1170 = vmatprep.subr.bf16.mxu0 0
        %1171 = vmatpush1.bf16.msra.mxu0 0
        %1172 = vmatprep.mubr.bf16.mxu0 0
        %1173 = vmatmul.mubr.bf16.gmra.mrb[0].mxu0 %v1138
        %v1174 = vpop.f32.mrb[0].mxu0
        %v1175 = vadd.f32 %v1123, %v1174
        %v1176 = vpop.f32.mrb[0].mxu0
        %v1177 = vpop.f32.mrb[0].mxu0
        %v1178 = vpop.f32.mrb[0].mxu0
        %1179 = vdwg.mxu0
        %v1180 = vadd.f32 %v1175, %v1040
        %v1181 = vsel %vm650, %v1180, 0.0
        %1182 = vadd.xlane.f32.xlu0 %v1181
        %v1183 = vpop.xlane.xlu0 %1182
        %v1184 = vmul.f32 %v1183, %v1030
        %v1185 = vsub.f32 %v1180, %v1184
        %v1186 = vmul.f32 %v1185, %v1185
        %v1187 = vsel %vm650, %v1186, 0.0
        %1188 = vadd.xlane.f32.xlu0 %v1187
        %v1189 = vpop.xlane.xlu0 %1188
        %v1190 = vmul.f32 %v1189, %v1030
        %v1191 = vadd.f32 %v1190, 1e-05
        %v1192 = vrsqrt.pop %v1191
        %v1193 = vmul.f32 %v1185, %v1192
        %v1194 = vpack.c.bf16 %v1193, %v1193
        %v1195 = vld [vmem:[%s11] sm:$0xf]
        %v1196 = vld [vmem:[%s11 + $0x4] sm:$0xf]
        %v1197 = vld [vmem:[%s11 + $0x8] sm:$0xf]
        %v1198 = vld [vmem:[%s11 + $0xc] sm:$0xf]
        %v1199 = vld [vmem:[%s12] sm:$0x1]
        %v1201 = vlaneseq
        %v1202 = vshrl.u32 %v1201, 7
        %v1203 = vsub.s32 0, %v1202
        %v1204 = vrot.slane %v1199, %v1203
        %v1210 = vunpack.c.l.b16 %v1195
        %v1211 = vunpack.c.l.b16 %v1196
        %v1212 = vunpack.c.l.b16 %v1197
        %v1213 = vunpack.c.l.b16 %v1198
        %v1214 = vpack.c.b16 %v1211, %v1210
        %v1215 = vpack.c.b16 %v1213, %v1212
        %v1219 = vsel %vm650, %v1194, 0
        %1221 = vmatprep.subr.bf16.mxu0 0
        %1222 = vmatpush1.bf16.msra.mxu0 %v1214
        %1223 = vmatprep.subr.bf16.mxu0 0
        %1224 = vmatpush1.bf16.msra.mxu0 %v1215
        %1225 = vmatprep.subr.bf16.mxu0 0
        %1226 = vmatpush1.bf16.msra.mxu0 0
        %1227 = vmatprep.subr.bf16.mxu0 0
        %1228 = vmatpush1.bf16.msra.mxu0 0
        %1229 = vmatprep.subr.bf16.mxu0 0
        %1230 = vmatpush1.bf16.msra.mxu0 0
        %1231 = vmatprep.subr.bf16.mxu0 0
        %1232 = vmatpush1.bf16.msra.mxu0 0
        %1233 = vmatprep.subr.bf16.mxu0 0
        %1234 = vmatpush1.bf16.msra.mxu0 0
        %1235 = vmatprep.subr.bf16.mxu0 0
        %1236 = vmatpush1.bf16.msra.mxu0 0
        %1237 = vmatprep.subr.bf16.mxu0 0
        %1238 = vmatpush1.bf16.msra.mxu0 0
        %1239 = vmatprep.subr.bf16.mxu0 0
        %1240 = vmatpush1.bf16.msra.mxu0 0
        %1241 = vmatprep.subr.bf16.mxu0 0
        %1242 = vmatpush1.bf16.msra.mxu0 0
        %1243 = vmatprep.subr.bf16.mxu0 0
        %1244 = vmatpush1.bf16.msra.mxu0 0
        %1245 = vmatprep.subr.bf16.mxu0 0
        %1246 = vmatpush1.bf16.msra.mxu0 0
        %1247 = vmatprep.subr.bf16.mxu0 0
        %1248 = vmatpush1.bf16.msra.mxu0 0
        %1249 = vmatprep.subr.bf16.mxu0 0
        %1250 = vmatpush1.bf16.msra.mxu0 0
        %1251 = vmatprep.subr.bf16.mxu0 0
        %1252 = vmatpush1.bf16.msra.mxu0 0
        %1253 = vmatprep.mubr.bf16.mxu0 0
        %1254 = vmatmul.mubr.bf16.gmra.mrb[0].mxu0 %v1219
        %v1255 = vpop.f32.mrb[0].mxu0
        %v1256 = vadd.f32 %v1204, %v1255
        %v1257 = vpop.f32.mrb[0].mxu0
        %v1258 = vpop.f32.mrb[0].mxu0
        %v1259 = vpop.f32.mrb[0].mxu0
        %1260 = vdwg.mxu0
        %v1261 = vadd.f32 %v1256, 3.0
        %v1262 = vmax.f32 %v1261, 0.0
        %v1263 = vmin.f32 %v1262, 6.0
        %v1264 = vmul.f32 %v1256, %v1263
        %v1265 = vmul.f32 %v1264, 0.16666667
        %v1266 = vld [vmem:[%s13] sm:$0x1]
        %v1267 = vpack.c.bf16 %v1265, %v1265
        %v1268 = vld [vmem:[#allocation2] sm:$0x1]
        %1270 = vset.pattern.permute.xlu0 0
        %1271 = vperm.xlu0 %1270, %v1268
        %v1272 = vpop.permute.xlu0 %1271
        %v1274 = vlaneseq
        %v1275 = vshrl.u32 %v1274, 7
        %v1276 = vsub.s32 0, %v1275
        %v1277 = vrot.slane %v1272, %v1276
        %v1279 = vsel %vm650, %v1266, 0
        %v1282 = vsel %vm650, %v1267, 0
        %1284 = vmatprep.subr.bf16.mxu0 0
        %1285 = vmatpush1.bf16.xpose.msra.mxu0 %v1282
        %1286 = vmatprep.subr.bf16.mxu0 0
        %1287 = vmatpush1.bf16.xpose.msra.mxu0 0
        %1288 = vmatprep.subr.bf16.mxu0 0
        %1289 = vmatpush1.bf16.xpose.msra.mxu0 0
        %1290 = vmatprep.subr.bf16.mxu0 0
        %1291 = vmatpush1.bf16.xpose.msra.mxu0 0
        %1292 = vmatprep.subr.bf16.mxu0 0
        %1293 = vmatpush1.bf16.xpose.msra.mxu0 0
        %1294 = vmatprep.subr.bf16.mxu0 0
        %1295 = vmatpush1.bf16.xpose.msra.mxu0 0
        %1296 = vmatprep.subr.bf16.mxu0 0
        %1297 = vmatpush1.bf16.xpose.msra.mxu0 0
        %1298 = vmatprep.subr.bf16.mxu0 0
        %1299 = vmatpush1.bf16.xpose.msra.mxu0 0
        %1300 = vmatprep.subr.bf16.mxu0 0
        %1301 = vmatpush1.bf16.xpose.msra.mxu0 0
        %1302 = vmatprep.subr.bf16.mxu0 0
        %1303 = vmatpush1.bf16.xpose.msra.mxu0 0
        %1304 = vmatprep.subr.bf16.mxu0 0
        %1305 = vmatpush1.bf16.xpose.msra.mxu0 0
        %1306 = vmatprep.subr.bf16.mxu0 0
        %1307 = vmatpush1.bf16.xpose.msra.mxu0 0
        %1308 = vmatprep.subr.bf16.mxu0 0
        %1309 = vmatpush1.bf16.xpose.msra.mxu0 0
        %1310 = vmatprep.subr.bf16.mxu0 0
        %1311 = vmatpush1.bf16.xpose.msra.mxu0 0
        %1312 = vmatprep.subr.bf16.mxu0 0
        %1313 = vmatpush1.bf16.xpose.msra.mxu0 0
        %1314 = vmatprep.subr.bf16.mxu0 0
        %1315 = vmatpush1.bf16.xpose.msra.mxu0 0
        %1316 = vmatprep.mubr.bf16.mxu0 0
        %1317 = vmatmul.mubr.bf16.gmra.mrb[0].mxu0 %v1279
        %v1318 = vpop.f32.mrb[0].mxu0
        %v1319 = vadd.f32 %v1277, %v1318
        %v1320 = vpop.f32.mrb[0].mxu0
        %v1321 = vpop.f32.mrb[0].mxu0
        %v1322 = vpop.f32.mrb[0].mxu0
        %1323 = vdwg.mxu0
        %vm1324 = vcmask 57344
        %1325 = vst.msk [vmem:[%s568] sm:$0x1] %vm1324, %v1319
        %s1326 = sand.u32 %s363, 1
        %s1327 = scalar_lea.sflag [#allocation5], %s1326
        %s1328 = sand.u32 %s363, 1
        %s1329 = scalar_lea.vmem [#allocation14], %s1328
        // Predicated region
        $region105: #{tpu_custom_call.1} parent=79 // pred_check
          %p1330 = pneg %p373
        $region106: #{tpu_custom_call.1} parent=79 // pred_check_branch
          %1332 = sbr.rel (%p1330) target = $region108
        $region107: #{tpu_custom_call.1} parent=79 // pred_region
          %s1334 = ssub.s32 16, 16
          %1335 = vsyncadd %s1327, %s1334
          %s1336 = smul.addr %s35, 16
          %s1337 = scalar_lea.hbm %s15, %s1336
          %s1339 = sshll.u32 %s1329, 4
          %s1340 = int_to_ptr.vmem [resolvable:$true] %s1339
          %1342 = dma.vmem_to_hbm [thread:$0]  %s1340, 16, %s1337, %s1327
        $region108: #{tpu_custom_call.1} parent=79 // pred_fallthru
          _
      $region80: #{tpu_custom_call.1} parent=5 // pred_fallthru
        _
      %p1343 = scmp.le.s32.totalorder 2, %s30
      // Predicated region
      $region109: #{tpu_custom_call.1} parent=5 // pred_check
        %p1344 = pneg %p1343
      $region110: #{tpu_custom_call.1} parent=5 // pred_check_branch
        %1346 = sbr.rel (%p1344) target = $region112
      $region111: #{tpu_custom_call.1} parent=5 // pred_region
        %s1347 = ssub.s32 %s30, 2
        // Predicated region
        $region113: #{tpu_custom_call.1} parent=111 // pred_check
          %p1348 = pneg %p379
        $region114: #{tpu_custom_call.1} parent=111 // pred_check_branch
          %1350 = sbr.rel (%p1348) target = $region116
        $region115: #{tpu_custom_call.1} parent=111 // pred_region
          %s1351 = sand.u32 %s364, 1
          %s1352 = scalar_lea.sflag [#allocation5], %s1351
          %s1353 = sand.u32 %s364, 1
          %s1354 = scalar_lea.vmem [#allocation14], %s1353
          %1355 = dma.done %s1352, 16
        $region116: #{tpu_custom_call.1} parent=111 // pred_fallthru
          _
      $region112: #{tpu_custom_call.1} parent=5 // pred_fallthru
        _
    $region6: #{tpu_custom_call.1} parent=1 // loop_footer
      %s34 = sadd.s32 1, %s30
    $region7: #{tpu_custom_call.1} parent=1 // loop_footer_branch
      %29 = sbr.rel target = $region3
    $region8: #{tpu_custom_call.1} parent=1 // loop_exit
      _
    %1356 = vsyncpa [#allocation4], 1
    %s1357 = scalar_lea.sflag [#allocation4], 1
    %1358 = vsyncpa %s1357, 1
    %1359 = vsyncpa [#allocation7], 1
    %1360 = vsyncpa [#allocation10], 1
    %1361 = vsyncpa [#allocation13], 1
    %1362 = vsyncpa [#allocation5], 1
    %s1363 = scalar_lea.sflag [#allocation5], 1
    %1364 = vsyncpa %s1363, 1

</llo_original>
